<compile_context>
chip_gen: v6e
topology: v6e:2x2x1
jax: 0.10.0
libtpu: 0.0.40
codegen_flags: <defaults>
</compile_context>

<pallas_src>
import functools

import jax
import jax.numpy as jnp
from jax.experimental import pallas as pl
from jax.experimental.pallas import tpu as pltpu

LANE = 128
SUBLANE = 8


def _round_up(n, m):
    return ((n + m - 1) // m) * m


def textrnn_kernel(ids_ref, table_ref, whh_ref, wout_ref, bout_ref,
                   out_ref, xproj_ref, *, seq_len, batch):
    """Entire forward pass in a single invocation.

    ids_ref   : SMEM (S, B) int32       word indices, time-major
    table_ref : VMEM (C, 1, Hp)         W_ih^T rows with (b_ih + b_hh) folded in
    whh_ref   : VMEM (Hp, Hp)           W_hh^T
    wout_ref  : VMEM (Hp, Cp)           output projection W
    bout_ref  : VMEM (1, Cp)            output bias b
    out_ref   : VMEM (Bp, Cp)           logits (padded)
    xproj_ref : VMEM (S, Bp, Hp) scratch  gathered input projections
    """
    # --- Input projection as a table gather (one-hot(x_t) @ W_ih^T + biases
    # == table[word_id]; exact because inputs are exact one-hot rows). ---
    xproj_ref[...] = jnp.zeros_like(xproj_ref)  # zero the padded batch rows
    for t in range(seq_len):
        for b in range(batch):
            idx = ids_ref[t, b]
            xproj_ref[t, pl.ds(b, 1), :] = table_ref[idx]   # (1, Hp) row copy

    whh = whh_ref[...]                           # load recurrent weight once
    bp, hp = xproj_ref.shape[1], xproj_ref.shape[2]

    # --- Serial recurrence: h lives in vregs; per-step work is one
    # (Bp,Hp)x(Hp,Hp) MXU push plus a tanh.  h_0 = 0 so step 0 skips the dot.
    if seq_len == 0:
        h = jnp.zeros((bp, hp), jnp.float32)
    else:
        h = jnp.tanh(xproj_ref[0])
        for t in range(1, seq_len):
            h = jnp.tanh(xproj_ref[t] +
                         jnp.dot(h, whh, preferred_element_type=jnp.float32))

    # --- Output projection (single matmul + one bias broadcast). ---
    out_ref[...] = (
        jnp.dot(h, wout_ref[...], preferred_element_type=jnp.float32)
        + bout_ref[...]
    ).astype(out_ref.dtype)


def textrnn_forward(word_ids, W_ih, W_hh, b_ih, b_hh, W, b):
    """word_ids: (B, S) int32 indices (the module's X is one_hot(word_ids)).

    Returns logits of shape (B, n_class).
    """
    B, S = word_ids.shape
    H, C = W_ih.shape              # nn.RNN weight_ih: (n_hidden, n_class)
    f32 = jnp.float32

    Bp = _round_up(max(B, 1), SUBLANE)
    Hp = _round_up(H, LANE)
    Cp = _round_up(C, LANE)

    # Fold both RNN biases into the input-projection table (exact for one-hot
    # inputs).  NOTE: if weights are reused across many calls, hoist these
    # padded params out of the per-call path.
    table = jnp.pad((W_ih.T + (b_ih + b_hh)[None, :]).astype(f32),
                    ((0, 0), (0, Hp - H)))[:, None, :]        # (C, 1, Hp)
    whh_t = jnp.pad(W_hh.T.astype(f32), ((0, Hp - H), (0, Hp - H)))
    wout = jnp.pad(W.astype(f32), ((0, Hp - H), (0, Cp - C)))
    bout = jnp.pad(b.astype(f32)[None, :], ((0, 0), (0, Cp - C)))
    ids = jnp.transpose(word_ids).astype(jnp.int32)           # (S, B) time-major

    out_padded = pl.pallas_call(
        functools.partial(textrnn_kernel, seq_len=S, batch=B),
        out_shape=jax.ShapeDtypeStruct((Bp, Cp), f32),
        # Single invocation (no grid): everything resident, weights DMA'd once.
        in_specs=[
            pl.BlockSpec(memory_space=pltpu.MemorySpace.SMEM),   # ids
            pl.BlockSpec(memory_space=pltpu.MemorySpace.VMEM),   # table
            pl.BlockSpec(memory_space=pltpu.MemorySpace.VMEM),   # W_hh^T
            pl.BlockSpec(memory_space=pltpu.MemorySpace.VMEM),   # W
            pl.BlockSpec(memory_space=pltpu.MemorySpace.VMEM),   # b
        ],
        out_specs=pl.BlockSpec(memory_space=pltpu.MemorySpace.VMEM),
        scratch_shapes=[pltpu.VMEM((S, Bp, Hp), f32)],
    )(ids, table, whh_t, wout, bout)

    return out_padded[:B, :C]


def textrnn_reference(word_ids, W_ih, W_hh, b_ih, b_hh, W, b):
    """Pure-JAX reference mirroring nn.RNN(tanh) + linear head on one-hot X."""
    C = W_ih.shape[1]
    X = jax.nn.one_hot(word_ids, C, dtype=jnp.float32)     # (B, S, C)
    Xt = jnp.transpose(X, (1, 0, 2))                        # (S, B, C)
    Bsz = X.shape[0]
    H = W_hh.shape[0]
    h = jnp.zeros((Bsz, H), jnp.float32)
    for t in range(Xt.shape[0]):
        h = jnp.tanh(Xt[t] @ W_ih.T + b_ih + h @ W_hh.T + b_hh)
    return h @ W + b


if __name__ == "__main__":
    # Small shapes consistent with the module (vocab-indexed inputs, tiny RNN).
    batch, seq_len, n_class, n_hidden = 4, 8, 16, 8

    key = jax.random.PRNGKey(0)
    k_idx, k_wih, k_whh, k_bih, k_bhh, k_w, k_b = jax.random.split(key, 7)

    word_ids = jax.random.randint(k_idx, (batch, seq_len), 0, n_class,
                                  dtype=jnp.int32)

    W_ih = jax.random.normal(k_wih, (n_hidden, n_class), jnp.float32) * 0.3
    W_hh = jax.random.normal(k_whh, (n_hidden, n_hidden), jnp.float32) * 0.3
    b_ih = jax.random.normal(k_bih, (n_hidden,), jnp.float32) * 0.1
    b_hh = jax.random.normal(k_bhh, (n_hidden,), jnp.float32) * 0.1
    W = jax.random.normal(k_w, (n_hidden, n_class), jnp.float32)
    b = jax.random.normal(k_b, (n_class,), jnp.float32)

    fwd = jax.jit(textrnn_forward)
    out = jax.block_until_ready(fwd(word_ids, W_ih, W_hh, b_ih, b_hh, W, b))

    ref = textrnn_reference(word_ids, W_ih, W_hh, b_ih, b_hh, W, b)
    assert out.shape == (batch, n_class)
    assert jnp.allclose(out, ref, atol=1e-4, rtol=1e-4), "mismatch vs reference"

    print("KERNEL_OK")
</pallas_src>

<mosaic_0001>
module attributes {stable_mosaic.version = 11 : i64} {
  func.func @textrnn_kernel(%arg0: memref<8x4xi32, #tpu.memory_space<smem>>, %arg1: memref<16x1x128xf32, #tpu.memory_space<vmem>>, %arg2: memref<128x128xf32, #tpu.memory_space<vmem>>, %arg3: memref<128x128xf32, #tpu.memory_space<vmem>>, %arg4: memref<1x128xf32, #tpu.memory_space<vmem>>, %arg5: memref<8x128xf32, #tpu.memory_space<vmem>>, %arg6: memref<8x8x128xf32, #tpu.memory_space<vmem>>) attributes {dimension_semantics = [], scalar_prefetch = 0 : i64, scratch_operands = 1 : i64, tpu.core_type = #tpu.core_type<tc>} {
    %cst = arith.constant 0.000000e+00 : f32
    %0 = vector.broadcast %cst : f32 to vector<8x8x128xf32>
    %c0 = arith.constant 0 : index
    %c0_0 = arith.constant 0 : index
    %c0_1 = arith.constant 0 : index
    %1 = vector.load %arg6[%c0, %c0_0, %c0_1] : memref<8x8x128xf32, #tpu.memory_space<vmem>>, vector<8x8x128xf32>
    tpu.vector_store %arg6[%c0, %c0_0, %c0_1], %0 {strides = array<i32>} : memref<8x8x128xf32, #tpu.memory_space<vmem>>, vector<8x8x128xf32>,
    %c0_2 = arith.constant 0 : index
    %c0_3 = arith.constant 0 : index
    %2 = memref.load %arg0[%c0_2, %c0_3] : memref<8x4xi32, #tpu.memory_space<smem>>
    %3 = arith.index_cast %2 : i32 to index
    %c0_4 = arith.constant 0 : index
    %c0_5 = arith.constant 0 : index
    %4 = vector.load %arg1[%3, %c0_4, %c0_5] : memref<16x1x128xf32, #tpu.memory_space<vmem>>, vector<1x1x128xf32>
    %5 = vector.shape_cast %4 : vector<1x1x128xf32> to vector<1x128xf32>
    %c0_6 = arith.constant 0 : index
    %c0_7 = arith.constant 0 : index
    %c0_8 = arith.constant 0 : index
    %6 = vector.load %arg6[%c0_6, %c0_7, %c0_8] : memref<8x8x128xf32, #tpu.memory_space<vmem>>, vector<1x1x128xf32>
    %7 = vector.shape_cast %6 : vector<1x1x128xf32> to vector<1x128xf32>
    %8 = vector.shape_cast %5 : vector<1x128xf32> to vector<1x1x128xf32>
    tpu.vector_store %arg6[%c0_6, %c0_7, %c0_8], %8 {strides = array<i32>} : memref<8x8x128xf32, #tpu.memory_space<vmem>>, vector<1x1x128xf32>,
    %c0_9 = arith.constant 0 : index
    %c1 = arith.constant 1 : index
    %9 = memref.load %arg0[%c0_9, %c1] : memref<8x4xi32, #tpu.memory_space<smem>>
    %10 = arith.index_cast %9 : i32 to index
    %c0_10 = arith.constant 0 : index
    %c0_11 = arith.constant 0 : index
    %11 = vector.load %arg1[%10, %c0_10, %c0_11] : memref<16x1x128xf32, #tpu.memory_space<vmem>>, vector<1x1x128xf32>
    %12 = vector.shape_cast %11 : vector<1x1x128xf32> to vector<1x128xf32>
    %c0_12 = arith.constant 0 : index
    %c1_13 = arith.constant 1 : index
    %c0_14 = arith.constant 0 : index
    %13 = vector.load %arg6[%c0_12, %c1_13, %c0_14] : memref<8x8x128xf32, #tpu.memory_space<vmem>>, vector<1x1x128xf32>
    %14 = vector.shape_cast %13 : vector<1x1x128xf32> to vector<1x128xf32>
    %15 = vector.shape_cast %12 : vector<1x128xf32> to vector<1x1x128xf32>
    tpu.vector_store %arg6[%c0_12, %c1_13, %c0_14], %15 {strides = array<i32>} : memref<8x8x128xf32, #tpu.memory_space<vmem>>, vector<1x1x128xf32>,
    %c0_15 = arith.constant 0 : index
    %c2 = arith.constant 2 : index
    %16 = memref.load %arg0[%c0_15, %c2] : memref<8x4xi32, #tpu.memory_space<smem>>
    %17 = arith.index_cast %16 : i32 to index
    %c0_16 = arith.constant 0 : index
    %c0_17 = arith.constant 0 : index
    %18 = vector.load %arg1[%17, %c0_16, %c0_17] : memref<16x1x128xf32, #tpu.memory_space<vmem>>, vector<1x1x128xf32>
    %19 = vector.shape_cast %18 : vector<1x1x128xf32> to vector<1x128xf32>
    %c0_18 = arith.constant 0 : index
    %c2_19 = arith.constant 2 : index
    %c0_20 = arith.constant 0 : index
    %20 = vector.load %arg6[%c0_18, %c2_19, %c0_20] : memref<8x8x128xf32, #tpu.memory_space<vmem>>, vector<1x1x128xf32>
    %21 = vector.shape_cast %20 : vector<1x1x128xf32> to vector<1x128xf32>
    %22 = vector.shape_cast %19 : vector<1x128xf32> to vector<1x1x128xf32>
    tpu.vector_store %arg6[%c0_18, %c2_19, %c0_20], %22 {strides = array<i32>} : memref<8x8x128xf32, #tpu.memory_space<vmem>>, vector<1x1x128xf32>,
    %c0_21 = arith.constant 0 : index
    %c3 = arith.constant 3 : index
    %23 = memref.load %arg0[%c0_21, %c3] : memref<8x4xi32, #tpu.memory_space<smem>>
    %24 = arith.index_cast %23 : i32 to index
    %c0_22 = arith.constant 0 : index
    %c0_23 = arith.constant 0 : index
    %25 = vector.load %arg1[%24, %c0_22, %c0_23] : memref<16x1x128xf32, #tpu.memory_space<vmem>>, vector<1x1x128xf32>
    %26 = vector.shape_cast %25 : vector<1x1x128xf32> to vector<1x128xf32>
    %c0_24 = arith.constant 0 : index
    %c3_25 = arith.constant 3 : index
    %c0_26 = arith.constant 0 : index
    %27 = vector.load %arg6[%c0_24, %c3_25, %c0_26] : memref<8x8x128xf32, #tpu.memory_space<vmem>>, vector<1x1x128xf32>
    %28 = vector.shape_cast %27 : vector<1x1x128xf32> to vector<1x128xf32>
    %29 = vector.shape_cast %26 : vector<1x128xf32> to vector<1x1x128xf32>
    tpu.vector_store %arg6[%c0_24, %c3_25, %c0_26], %29 {strides = array<i32>} : memref<8x8x128xf32, #tpu.memory_space<vmem>>, vector<1x1x128xf32>,
    %c1_27 = arith.constant 1 : index
    %c0_28 = arith.constant 0 : index
    %30 = memref.load %arg0[%c1_27, %c0_28] : memref<8x4xi32, #tpu.memory_space<smem>>
    %31 = arith.index_cast %30 : i32 to index
    %c0_29 = arith.constant 0 : index
    %c0_30 = arith.constant 0 : index
    %32 = vector.load %arg1[%31, %c0_29, %c0_30] : memref<16x1x128xf32, #tpu.memory_space<vmem>>, vector<1x1x128xf32>
    %33 = vector.shape_cast %32 : vector<1x1x128xf32> to vector<1x128xf32>
    %c1_31 = arith.constant 1 : index
    %c0_32 = arith.constant 0 : index
    %c0_33 = arith.constant 0 : index
    %34 = vector.load %arg6[%c1_31, %c0_32, %c0_33] : memref<8x8x128xf32, #tpu.memory_space<vmem>>, vector<1x1x128xf32>
    %35 = vector.shape_cast %34 : vector<1x1x128xf32> to vector<1x128xf32>
    %36 = vector.shape_cast %33 : vector<1x128xf32> to vector<1x1x128xf32>
    tpu.vector_store %arg6[%c1_31, %c0_32, %c0_33], %36 {strides = array<i32>} : memref<8x8x128xf32, #tpu.memory_space<vmem>>, vector<1x1x128xf32>,
    %c1_34 = arith.constant 1 : index
    %c1_35 = arith.constant 1 : index
    %37 = memref.load %arg0[%c1_34, %c1_35] : memref<8x4xi32, #tpu.memory_space<smem>>
    %38 = arith.index_cast %37 : i32 to index
    %c0_36 = arith.constant 0 : index
    %c0_37 = arith.constant 0 : index
    %39 = vector.load %arg1[%38, %c0_36, %c0_37] : memref<16x1x128xf32, #tpu.memory_space<vmem>>, vector<1x1x128xf32>
    %40 = vector.shape_cast %39 : vector<1x1x128xf32> to vector<1x128xf32>
    %c1_38 = arith.constant 1 : index
    %c1_39 = arith.constant 1 : index
    %c0_40 = arith.constant 0 : index
    %41 = vector.load %arg6[%c1_38, %c1_39, %c0_40] : memref<8x8x128xf32, #tpu.memory_space<vmem>>, vector<1x1x128xf32>
    %42 = vector.shape_cast %41 : vector<1x1x128xf32> to vector<1x128xf32>
    %43 = vector.shape_cast %40 : vector<1x128xf32> to vector<1x1x128xf32>
    tpu.vector_store %arg6[%c1_38, %c1_39, %c0_40], %43 {strides = array<i32>} : memref<8x8x128xf32, #tpu.memory_space<vmem>>, vector<1x1x128xf32>,
    %c1_41 = arith.constant 1 : index
    %c2_42 = arith.constant 2 : index
    %44 = memref.load %arg0[%c1_41, %c2_42] : memref<8x4xi32, #tpu.memory_space<smem>>
    %45 = arith.index_cast %44 : i32 to index
    %c0_43 = arith.constant 0 : index
    %c0_44 = arith.constant 0 : index
    %46 = vector.load %arg1[%45, %c0_43, %c0_44] : memref<16x1x128xf32, #tpu.memory_space<vmem>>, vector<1x1x128xf32>
    %47 = vector.shape_cast %46 : vector<1x1x128xf32> to vector<1x128xf32>
    %c1_45 = arith.constant 1 : index
    %c2_46 = arith.constant 2 : index
    %c0_47 = arith.constant 0 : index
    %48 = vector.load %arg6[%c1_45, %c2_46, %c0_47] : memref<8x8x128xf32, #tpu.memory_space<vmem>>, vector<1x1x128xf32>
    %49 = vector.shape_cast %48 : vector<1x1x128xf32> to vector<1x128xf32>
    %50 = vector.shape_cast %47 : vector<1x128xf32> to vector<1x1x128xf32>
    tpu.vector_store %arg6[%c1_45, %c2_46, %c0_47], %50 {strides = array<i32>} : memref<8x8x128xf32, #tpu.memory_space<vmem>>, vector<1x1x128xf32>,
    %c1_48 = arith.constant 1 : index
    %c3_49 = arith.constant 3 : index
    %51 = memref.load %arg0[%c1_48, %c3_49] : memref<8x4xi32, #tpu.memory_space<smem>>
    %52 = arith.index_cast %51 : i32 to index
    %c0_50 = arith.constant 0 : index
    %c0_51 = arith.constant 0 : index
    %53 = vector.load %arg1[%52, %c0_50, %c0_51] : memref<16x1x128xf32, #tpu.memory_space<vmem>>, vector<1x1x128xf32>
    %54 = vector.shape_cast %53 : vector<1x1x128xf32> to vector<1x128xf32>
    %c1_52 = arith.constant 1 : index
    %c3_53 = arith.constant 3 : index
    %c0_54 = arith.constant 0 : index
    %55 = vector.load %arg6[%c1_52, %c3_53, %c0_54] : memref<8x8x128xf32, #tpu.memory_space<vmem>>, vector<1x1x128xf32>
    %56 = vector.shape_cast %55 : vector<1x1x128xf32> to vector<1x128xf32>
    %57 = vector.shape_cast %54 : vector<1x128xf32> to vector<1x1x128xf32>
    tpu.vector_store %arg6[%c1_52, %c3_53, %c0_54], %57 {strides = array<i32>} : memref<8x8x128xf32, #tpu.memory_space<vmem>>, vector<1x1x128xf32>,
    %c2_55 = arith.constant 2 : index
    %c0_56 = arith.constant 0 : index
    %58 = memref.load %arg0[%c2_55, %c0_56] : memref<8x4xi32, #tpu.memory_space<smem>>
    %59 = arith.index_cast %58 : i32 to index
    %c0_57 = arith.constant 0 : index
    %c0_58 = arith.constant 0 : index
    %60 = vector.load %arg1[%59, %c0_57, %c0_58] : memref<16x1x128xf32, #tpu.memory_space<vmem>>, vector<1x1x128xf32>
    %61 = vector.shape_cast %60 : vector<1x1x128xf32> to vector<1x128xf32>
    %c2_59 = arith.constant 2 : index
    %c0_60 = arith.constant 0 : index
    %c0_61 = arith.constant 0 : index
    %62 = vector.load %arg6[%c2_59, %c0_60, %c0_61] : memref<8x8x128xf32, #tpu.memory_space<vmem>>, vector<1x1x128xf32>
    %63 = vector.shape_cast %62 : vector<1x1x128xf32> to vector<1x128xf32>
    %64 = vector.shape_cast %61 : vector<1x128xf32> to vector<1x1x128xf32>
    tpu.vector_store %arg6[%c2_59, %c0_60, %c0_61], %64 {strides = array<i32>} : memref<8x8x128xf32, #tpu.memory_space<vmem>>, vector<1x1x128xf32>,
    %c2_62 = arith.constant 2 : index
    %c1_63 = arith.constant 1 : index
    %65 = memref.load %arg0[%c2_62, %c1_63] : memref<8x4xi32, #tpu.memory_space<smem>>
    %66 = arith.index_cast %65 : i32 to index
    %c0_64 = arith.constant 0 : index
    %c0_65 = arith.constant 0 : index
    %67 = vector.load %arg1[%66, %c0_64, %c0_65] : memref<16x1x128xf32, #tpu.memory_space<vmem>>, vector<1x1x128xf32>
    %68 = vector.shape_cast %67 : vector<1x1x128xf32> to vector<1x128xf32>
    %c2_66 = arith.constant 2 : index
    %c1_67 = arith.constant 1 : index
    %c0_68 = arith.constant 0 : index
    %69 = vector.load %arg6[%c2_66, %c1_67, %c0_68] : memref<8x8x128xf32, #tpu.memory_space<vmem>>, vector<1x1x128xf32>
    %70 = vector.shape_cast %69 : vector<1x1x128xf32> to vector<1x128xf32>
    %71 = vector.shape_cast %68 : vector<1x128xf32> to vector<1x1x128xf32>
    tpu.vector_store %arg6[%c2_66, %c1_67, %c0_68], %71 {strides = array<i32>} : memref<8x8x128xf32, #tpu.memory_space<vmem>>, vector<1x1x128xf32>,
    %c2_69 = arith.constant 2 : index
    %c2_70 = arith.constant 2 : index
    %72 = memref.load %arg0[%c2_69, %c2_70] : memref<8x4xi32, #tpu.memory_space<smem>>
    %73 = arith.index_cast %72 : i32 to index
    %c0_71 = arith.constant 0 : index
    %c0_72 = arith.constant 0 : index
    %74 = vector.load %arg1[%73, %c0_71, %c0_72] : memref<16x1x128xf32, #tpu.memory_space<vmem>>, vector<1x1x128xf32>
    %75 = vector.shape_cast %74 : vector<1x1x128xf32> to vector<1x128xf32>
    %c2_73 = arith.constant 2 : index
    %c2_74 = arith.constant 2 : index
    %c0_75 = arith.constant 0 : index
    %76 = vector.load %arg6[%c2_73, %c2_74, %c0_75] : memref<8x8x128xf32, #tpu.memory_space<vmem>>, vector<1x1x128xf32>
    %77 = vector.shape_cast %76 : vector<1x1x128xf32> to vector<1x128xf32>
    %78 = vector.shape_cast %75 : vector<1x128xf32> to vector<1x1x128xf32>
    tpu.vector_store %arg6[%c2_73, %c2_74, %c0_75], %78 {strides = array<i32>} : memref<8x8x128xf32, #tpu.memory_space<vmem>>, vector<1x1x128xf32>,
    %c2_76 = arith.constant 2 : index
    %c3_77 = arith.constant 3 : index
    %79 = memref.load %arg0[%c2_76, %c3_77] : memref<8x4xi32, #tpu.memory_space<smem>>
    %80 = arith.index_cast %79 : i32 to index
    %c0_78 = arith.constant 0 : index
    %c0_79 = arith.constant 0 : index
    %81 = vector.load %arg1[%80, %c0_78, %c0_79] : memref<16x1x128xf32, #tpu.memory_space<vmem>>, vector<1x1x128xf32>
    %82 = vector.shape_cast %81 : vector<1x1x128xf32> to vector<1x128xf32>
    %c2_80 = arith.constant 2 : index
    %c3_81 = arith.constant 3 : index
    %c0_82 = arith.constant 0 : index
    %83 = vector.load %arg6[%c2_80, %c3_81, %c0_82] : memref<8x8x128xf32, #tpu.memory_space<vmem>>, vector<1x1x128xf32>
    %84 = vector.shape_cast %83 : vector<1x1x128xf32> to vector<1x128xf32>
    %85 = vector.shape_cast %82 : vector<1x128xf32> to vector<1x1x128xf32>
    tpu.vector_store %arg6[%c2_80, %c3_81, %c0_82], %85 {strides = array<i32>} : memref<8x8x128xf32, #tpu.memory_space<vmem>>, vector<1x1x128xf32>,
    %c3_83 = arith.constant 3 : index
    %c0_84 = arith.constant 0 : index
    %86 = memref.load %arg0[%c3_83, %c0_84] : memref<8x4xi32, #tpu.memory_space<smem>>
    %87 = arith.index_cast %86 : i32 to index
    %c0_85 = arith.constant 0 : index
    %c0_86 = arith.constant 0 : index
    %88 = vector.load %arg1[%87, %c0_85, %c0_86] : memref<16x1x128xf32, #tpu.memory_space<vmem>>, vector<1x1x128xf32>
    %89 = vector.shape_cast %88 : vector<1x1x128xf32> to vector<1x128xf32>
    %c3_87 = arith.constant 3 : index
    %c0_88 = arith.constant 0 : index
    %c0_89 = arith.constant 0 : index
    %90 = vector.load %arg6[%c3_87, %c0_88, %c0_89] : memref<8x8x128xf32, #tpu.memory_space<vmem>>, vector<1x1x128xf32>
    %91 = vector.shape_cast %90 : vector<1x1x128xf32> to vector<1x128xf32>
    %92 = vector.shape_cast %89 : vector<1x128xf32> to vector<1x1x128xf32>
    tpu.vector_store %arg6[%c3_87, %c0_88, %c0_89], %92 {strides = array<i32>} : memref<8x8x128xf32, #tpu.memory_space<vmem>>, vector<1x1x128xf32>,
    %c3_90 = arith.constant 3 : index
    %c1_91 = arith.constant 1 : index
    %93 = memref.load %arg0[%c3_90, %c1_91] : memref<8x4xi32, #tpu.memory_space<smem>>
    %94 = arith.index_cast %93 : i32 to index
    %c0_92 = arith.constant 0 : index
    %c0_93 = arith.constant 0 : index
    %95 = vector.load %arg1[%94, %c0_92, %c0_93] : memref<16x1x128xf32, #tpu.memory_space<vmem>>, vector<1x1x128xf32>
    %96 = vector.shape_cast %95 : vector<1x1x128xf32> to vector<1x128xf32>
    %c3_94 = arith.constant 3 : index
    %c1_95 = arith.constant 1 : index
    %c0_96 = arith.constant 0 : index
    %97 = vector.load %arg6[%c3_94, %c1_95, %c0_96] : memref<8x8x128xf32, #tpu.memory_space<vmem>>, vector<1x1x128xf32>
    %98 = vector.shape_cast %97 : vector<1x1x128xf32> to vector<1x128xf32>
    %99 = vector.shape_cast %96 : vector<1x128xf32> to vector<1x1x128xf32>
    tpu.vector_store %arg6[%c3_94, %c1_95, %c0_96], %99 {strides = array<i32>} : memref<8x8x128xf32, #tpu.memory_space<vmem>>, vector<1x1x128xf32>,
    %c3_97 = arith.constant 3 : index
    %c2_98 = arith.constant 2 : index
    %100 = memref.load %arg0[%c3_97, %c2_98] : memref<8x4xi32, #tpu.memory_space<smem>>
    %101 = arith.index_cast %100 : i32 to index
    %c0_99 = arith.constant 0 : index
    %c0_100 = arith.constant 0 : index
    %102 = vector.load %arg1[%101, %c0_99, %c0_100] : memref<16x1x128xf32, #tpu.memory_space<vmem>>, vector<1x1x128xf32>
    %103 = vector.shape_cast %102 : vector<1x1x128xf32> to vector<1x128xf32>
    %c3_101 = arith.constant 3 : index
    %c2_102 = arith.constant 2 : index
    %c0_103 = arith.constant 0 : index
    %104 = vector.load %arg6[%c3_101, %c2_102, %c0_103] : memref<8x8x128xf32, #tpu.memory_space<vmem>>, vector<1x1x128xf32>
    %105 = vector.shape_cast %104 : vector<1x1x128xf32> to vector<1x128xf32>
    %106 = vector.shape_cast %103 : vector<1x128xf32> to vector<1x1x128xf32>
    tpu.vector_store %arg6[%c3_101, %c2_102, %c0_103], %106 {strides = array<i32>} : memref<8x8x128xf32, #tpu.memory_space<vmem>>, vector<1x1x128xf32>,
    %c3_104 = arith.constant 3 : index
    %c3_105 = arith.constant 3 : index
    %107 = memref.load %arg0[%c3_104, %c3_105] : memref<8x4xi32, #tpu.memory_space<smem>>
    %108 = arith.index_cast %107 : i32 to index
    %c0_106 = arith.constant 0 : index
    %c0_107 = arith.constant 0 : index
    %109 = vector.load %arg1[%108, %c0_106, %c0_107] : memref<16x1x128xf32, #tpu.memory_space<vmem>>, vector<1x1x128xf32>
    %110 = vector.shape_cast %109 : vector<1x1x128xf32> to vector<1x128xf32>
    %c3_108 = arith.constant 3 : index
    %c3_109 = arith.constant 3 : index
    %c0_110 = arith.constant 0 : index
    %111 = vector.load %arg6[%c3_108, %c3_109, %c0_110] : memref<8x8x128xf32, #tpu.memory_space<vmem>>, vector<1x1x128xf32>
    %112 = vector.shape_cast %111 : vector<1x1x128xf32> to vector<1x128xf32>
    %113 = vector.shape_cast %110 : vector<1x128xf32> to vector<1x1x128xf32>
    tpu.vector_store %arg6[%c3_108, %c3_109, %c0_110], %113 {strides = array<i32>} : memref<8x8x128xf32, #tpu.memory_space<vmem>>, vector<1x1x128xf32>,
    %c4 = arith.constant 4 : index
    %c0_111 = arith.constant 0 : index
    %114 = memref.load %arg0[%c4, %c0_111] : memref<8x4xi32, #tpu.memory_space<smem>>
    %115 = arith.index_cast %114 : i32 to index
    %c0_112 = arith.constant 0 : index
    %c0_113 = arith.constant 0 : index
    %116 = vector.load %arg1[%115, %c0_112, %c0_113] : memref<16x1x128xf32, #tpu.memory_space<vmem>>, vector<1x1x128xf32>
    %117 = vector.shape_cast %116 : vector<1x1x128xf32> to vector<1x128xf32>
    %c4_114 = arith.constant 4 : index
    %c0_115 = arith.constant 0 : index
    %c0_116 = arith.constant 0 : index
    %118 = vector.load %arg6[%c4_114, %c0_115, %c0_116] : memref<8x8x128xf32, #tpu.memory_space<vmem>>, vector<1x1x128xf32>
    %119 = vector.shape_cast %118 : vector<1x1x128xf32> to vector<1x128xf32>
    %120 = vector.shape_cast %117 : vector<1x128xf32> to vector<1x1x128xf32>
    tpu.vector_store %arg6[%c4_114, %c0_115, %c0_116], %120 {strides = array<i32>} : memref<8x8x128xf32, #tpu.memory_space<vmem>>, vector<1x1x128xf32>,
    %c4_117 = arith.constant 4 : index
    %c1_118 = arith.constant 1 : index
    %121 = memref.load %arg0[%c4_117, %c1_118] : memref<8x4xi32, #tpu.memory_space<smem>>
    %122 = arith.index_cast %121 : i32 to index
    %c0_119 = arith.constant 0 : index
    %c0_120 = arith.constant 0 : index
    %123 = vector.load %arg1[%122, %c0_119, %c0_120] : memref<16x1x128xf32, #tpu.memory_space<vmem>>, vector<1x1x128xf32>
    %124 = vector.shape_cast %123 : vector<1x1x128xf32> to vector<1x128xf32>
    %c4_121 = arith.constant 4 : index
    %c1_122 = arith.constant 1 : index
    %c0_123 = arith.constant 0 : index
    %125 = vector.load %arg6[%c4_121, %c1_122, %c0_123] : memref<8x8x128xf32, #tpu.memory_space<vmem>>, vector<1x1x128xf32>
    %126 = vector.shape_cast %125 : vector<1x1x128xf32> to vector<1x128xf32>
    %127 = vector.shape_cast %124 : vector<1x128xf32> to vector<1x1x128xf32>
    tpu.vector_store %arg6[%c4_121, %c1_122, %c0_123], %127 {strides = array<i32>} : memref<8x8x128xf32, #tpu.memory_space<vmem>>, vector<1x1x128xf32>,
    %c4_124 = arith.constant 4 : index
    %c2_125 = arith.constant 2 : index
    %128 = memref.load %arg0[%c4_124, %c2_125] : memref<8x4xi32, #tpu.memory_space<smem>>
    %129 = arith.index_cast %128 : i32 to index
    %c0_126 = arith.constant 0 : index
    %c0_127 = arith.constant 0 : index
    %130 = vector.load %arg1[%129, %c0_126, %c0_127] : memref<16x1x128xf32, #tpu.memory_space<vmem>>, vector<1x1x128xf32>
    %131 = vector.shape_cast %130 : vector<1x1x128xf32> to vector<1x128xf32>
    %c4_128 = arith.constant 4 : index
    %c2_129 = arith.constant 2 : index
    %c0_130 = arith.constant 0 : index
    %132 = vector.load %arg6[%c4_128, %c2_129, %c0_130] : memref<8x8x128xf32, #tpu.memory_space<vmem>>, vector<1x1x128xf32>
    %133 = vector.shape_cast %132 : vector<1x1x128xf32> to vector<1x128xf32>
    %134 = vector.shape_cast %131 : vector<1x128xf32> to vector<1x1x128xf32>
    tpu.vector_store %arg6[%c4_128, %c2_129, %c0_130], %134 {strides = array<i32>} : memref<8x8x128xf32, #tpu.memory_space<vmem>>, vector<1x1x128xf32>,
    %c4_131 = arith.constant 4 : index
    %c3_132 = arith.constant 3 : index
    %135 = memref.load %arg0[%c4_131, %c3_132] : memref<8x4xi32, #tpu.memory_space<smem>>
    %136 = arith.index_cast %135 : i32 to index
    %c0_133 = arith.constant 0 : index
    %c0_134 = arith.constant 0 : index
    %137 = vector.load %arg1[%136, %c0_133, %c0_134] : memref<16x1x128xf32, #tpu.memory_space<vmem>>, vector<1x1x128xf32>
    %138 = vector.shape_cast %137 : vector<1x1x128xf32> to vector<1x128xf32>
    %c4_135 = arith.constant 4 : index
    %c3_136 = arith.constant 3 : index
    %c0_137 = arith.constant 0 : index
    %139 = vector.load %arg6[%c4_135, %c3_136, %c0_137] : memref<8x8x128xf32, #tpu.memory_space<vmem>>, vector<1x1x128xf32>
    %140 = vector.shape_cast %139 : vector<1x1x128xf32> to vector<1x128xf32>
    %141 = vector.shape_cast %138 : vector<1x128xf32> to vector<1x1x128xf32>
    tpu.vector_store %arg6[%c4_135, %c3_136, %c0_137], %141 {strides = array<i32>} : memref<8x8x128xf32, #tpu.memory_space<vmem>>, vector<1x1x128xf32>,
    %c5 = arith.constant 5 : index
    %c0_138 = arith.constant 0 : index
    %142 = memref.load %arg0[%c5, %c0_138] : memref<8x4xi32, #tpu.memory_space<smem>>
    %143 = arith.index_cast %142 : i32 to index
    %c0_139 = arith.constant 0 : index
    %c0_140 = arith.constant 0 : index
    %144 = vector.load %arg1[%143, %c0_139, %c0_140] : memref<16x1x128xf32, #tpu.memory_space<vmem>>, vector<1x1x128xf32>
    %145 = vector.shape_cast %144 : vector<1x1x128xf32> to vector<1x128xf32>
    %c5_141 = arith.constant 5 : index
    %c0_142 = arith.constant 0 : index
    %c0_143 = arith.constant 0 : index
    %146 = vector.load %arg6[%c5_141, %c0_142, %c0_143] : memref<8x8x128xf32, #tpu.memory_space<vmem>>, vector<1x1x128xf32>
    %147 = vector.shape_cast %146 : vector<1x1x128xf32> to vector<1x128xf32>
    %148 = vector.shape_cast %145 : vector<1x128xf32> to vector<1x1x128xf32>
    tpu.vector_store %arg6[%c5_141, %c0_142, %c0_143], %148 {strides = array<i32>} : memref<8x8x128xf32, #tpu.memory_space<vmem>>, vector<1x1x128xf32>,
    %c5_144 = arith.constant 5 : index
    %c1_145 = arith.constant 1 : index
    %149 = memref.load %arg0[%c5_144, %c1_145] : memref<8x4xi32, #tpu.memory_space<smem>>
    %150 = arith.index_cast %149 : i32 to index
    %c0_146 = arith.constant 0 : index
    %c0_147 = arith.constant 0 : index
    %151 = vector.load %arg1[%150, %c0_146, %c0_147] : memref<16x1x128xf32, #tpu.memory_space<vmem>>, vector<1x1x128xf32>
    %152 = vector.shape_cast %151 : vector<1x1x128xf32> to vector<1x128xf32>
    %c5_148 = arith.constant 5 : index
    %c1_149 = arith.constant 1 : index
    %c0_150 = arith.constant 0 : index
    %153 = vector.load %arg6[%c5_148, %c1_149, %c0_150] : memref<8x8x128xf32, #tpu.memory_space<vmem>>, vector<1x1x128xf32>
    %154 = vector.shape_cast %153 : vector<1x1x128xf32> to vector<1x128xf32>
    %155 = vector.shape_cast %152 : vector<1x128xf32> to vector<1x1x128xf32>
    tpu.vector_store %arg6[%c5_148, %c1_149, %c0_150], %155 {strides = array<i32>} : memref<8x8x128xf32, #tpu.memory_space<vmem>>, vector<1x1x128xf32>,
    %c5_151 = arith.constant 5 : index
    %c2_152 = arith.constant 2 : index
    %156 = memref.load %arg0[%c5_151, %c2_152] : memref<8x4xi32, #tpu.memory_space<smem>>
    %157 = arith.index_cast %156 : i32 to index
    %c0_153 = arith.constant 0 : index
    %c0_154 = arith.constant 0 : index
    %158 = vector.load %arg1[%157, %c0_153, %c0_154] : memref<16x1x128xf32, #tpu.memory_space<vmem>>, vector<1x1x128xf32>
    %159 = vector.shape_cast %158 : vector<1x1x128xf32> to vector<1x128xf32>
    %c5_155 = arith.constant 5 : index
    %c2_156 = arith.constant 2 : index
    %c0_157 = arith.constant 0 : index
    %160 = vector.load %arg6[%c5_155, %c2_156, %c0_157] : memref<8x8x128xf32, #tpu.memory_space<vmem>>, vector<1x1x128xf32>
    %161 = vector.shape_cast %160 : vector<1x1x128xf32> to vector<1x128xf32>
    %162 = vector.shape_cast %159 : vector<1x128xf32> to vector<1x1x128xf32>
    tpu.vector_store %arg6[%c5_155, %c2_156, %c0_157], %162 {strides = array<i32>} : memref<8x8x128xf32, #tpu.memory_space<vmem>>, vector<1x1x128xf32>,
    %c5_158 = arith.constant 5 : index
    %c3_159 = arith.constant 3 : index
    %163 = memref.load %arg0[%c5_158, %c3_159] : memref<8x4xi32, #tpu.memory_space<smem>>
    %164 = arith.index_cast %163 : i32 to index
    %c0_160 = arith.constant 0 : index
    %c0_161 = arith.constant 0 : index
    %165 = vector.load %arg1[%164, %c0_160, %c0_161] : memref<16x1x128xf32, #tpu.memory_space<vmem>>, vector<1x1x128xf32>
    %166 = vector.shape_cast %165 : vector<1x1x128xf32> to vector<1x128xf32>
    %c5_162 = arith.constant 5 : index
    %c3_163 = arith.constant 3 : index
    %c0_164 = arith.constant 0 : index
    %167 = vector.load %arg6[%c5_162, %c3_163, %c0_164] : memref<8x8x128xf32, #tpu.memory_space<vmem>>, vector<1x1x128xf32>
    %168 = vector.shape_cast %167 : vector<1x1x128xf32> to vector<1x128xf32>
    %169 = vector.shape_cast %166 : vector<1x128xf32> to vector<1x1x128xf32>
    tpu.vector_store %arg6[%c5_162, %c3_163, %c0_164], %169 {strides = array<i32>} : memref<8x8x128xf32, #tpu.memory_space<vmem>>, vector<1x1x128xf32>,
    %c6 = arith.constant 6 : index
    %c0_165 = arith.constant 0 : index
    %170 = memref.load %arg0[%c6, %c0_165] : memref<8x4xi32, #tpu.memory_space<smem>>
    %171 = arith.index_cast %170 : i32 to index
    %c0_166 = arith.constant 0 : index
    %c0_167 = arith.constant 0 : index
    %172 = vector.load %arg1[%171, %c0_166, %c0_167] : memref<16x1x128xf32, #tpu.memory_space<vmem>>, vector<1x1x128xf32>
    %173 = vector.shape_cast %172 : vector<1x1x128xf32> to vector<1x128xf32>
    %c6_168 = arith.constant 6 : index
    %c0_169 = arith.constant 0 : index
    %c0_170 = arith.constant 0 : index
    %174 = vector.load %arg6[%c6_168, %c0_169, %c0_170] : memref<8x8x128xf32, #tpu.memory_space<vmem>>, vector<1x1x128xf32>
    %175 = vector.shape_cast %174 : vector<1x1x128xf32> to vector<1x128xf32>
    %176 = vector.shape_cast %173 : vector<1x128xf32> to vector<1x1x128xf32>
    tpu.vector_store %arg6[%c6_168, %c0_169, %c0_170], %176 {strides = array<i32>} : memref<8x8x128xf32, #tpu.memory_space<vmem>>, vector<1x1x128xf32>,
    %c6_171 = arith.constant 6 : index
    %c1_172 = arith.constant 1 : index
    %177 = memref.load %arg0[%c6_171, %c1_172] : memref<8x4xi32, #tpu.memory_space<smem>>
    %178 = arith.index_cast %177 : i32 to index
    %c0_173 = arith.constant 0 : index
    %c0_174 = arith.constant 0 : index
    %179 = vector.load %arg1[%178, %c0_173, %c0_174] : memref<16x1x128xf32, #tpu.memory_space<vmem>>, vector<1x1x128xf32>
    %180 = vector.shape_cast %179 : vector<1x1x128xf32> to vector<1x128xf32>
    %c6_175 = arith.constant 6 : index
    %c1_176 = arith.constant 1 : index
    %c0_177 = arith.constant 0 : index
    %181 = vector.load %arg6[%c6_175, %c1_176, %c0_177] : memref<8x8x128xf32, #tpu.memory_space<vmem>>, vector<1x1x128xf32>
    %182 = vector.shape_cast %181 : vector<1x1x128xf32> to vector<1x128xf32>
    %183 = vector.shape_cast %180 : vector<1x128xf32> to vector<1x1x128xf32>
    tpu.vector_store %arg6[%c6_175, %c1_176, %c0_177], %183 {strides = array<i32>} : memref<8x8x128xf32, #tpu.memory_space<vmem>>, vector<1x1x128xf32>,
    %c6_178 = arith.constant 6 : index
    %c2_179 = arith.constant 2 : index
    %184 = memref.load %arg0[%c6_178, %c2_179] : memref<8x4xi32, #tpu.memory_space<smem>>
    %185 = arith.index_cast %184 : i32 to index
    %c0_180 = arith.constant 0 : index
    %c0_181 = arith.constant 0 : index
    %186 = vector.load %arg1[%185, %c0_180, %c0_181] : memref<16x1x128xf32, #tpu.memory_space<vmem>>, vector<1x1x128xf32>
    %187 = vector.shape_cast %186 : vector<1x1x128xf32> to vector<1x128xf32>
    %c6_182 = arith.constant 6 : index
    %c2_183 = arith.constant 2 : index
    %c0_184 = arith.constant 0 : index
    %188 = vector.load %arg6[%c6_182, %c2_183, %c0_184] : memref<8x8x128xf32, #tpu.memory_space<vmem>>, vector<1x1x128xf32>
    %189 = vector.shape_cast %188 : vector<1x1x128xf32> to vector<1x128xf32>
    %190 = vector.shape_cast %187 : vector<1x128xf32> to vector<1x1x128xf32>
    tpu.vector_store %arg6[%c6_182, %c2_183, %c0_184], %190 {strides = array<i32>} : memref<8x8x128xf32, #tpu.memory_space<vmem>>, vector<1x1x128xf32>,
    %c6_185 = arith.constant 6 : index
    %c3_186 = arith.constant 3 : index
    %191 = memref.load %arg0[%c6_185, %c3_186] : memref<8x4xi32, #tpu.memory_space<smem>>
    %192 = arith.index_cast %191 : i32 to index
    %c0_187 = arith.constant 0 : index
    %c0_188 = arith.constant 0 : index
    %193 = vector.load %arg1[%192, %c0_187, %c0_188] : memref<16x1x128xf32, #tpu.memory_space<vmem>>, vector<1x1x128xf32>
    %194 = vector.shape_cast %193 : vector<1x1x128xf32> to vector<1x128xf32>
    %c6_189 = arith.constant 6 : index
    %c3_190 = arith.constant 3 : index
    %c0_191 = arith.constant 0 : index
    %195 = vector.load %arg6[%c6_189, %c3_190, %c0_191] : memref<8x8x128xf32, #tpu.memory_space<vmem>>, vector<1x1x128xf32>
    %196 = vector.shape_cast %195 : vector<1x1x128xf32> to vector<1x128xf32>
    %197 = vector.shape_cast %194 : vector<1x128xf32> to vector<1x1x128xf32>
    tpu.vector_store %arg6[%c6_189, %c3_190, %c0_191], %197 {strides = array<i32>} : memref<8x8x128xf32, #tpu.memory_space<vmem>>, vector<1x1x128xf32>,
    %c7 = arith.constant 7 : index
    %c0_192 = arith.constant 0 : index
    %198 = memref.load %arg0[%c7, %c0_192] : memref<8x4xi32, #tpu.memory_space<smem>>
    %199 = arith.index_cast %198 : i32 to index
    %c0_193 = arith.constant 0 : index
    %c0_194 = arith.constant 0 : index
    %200 = vector.load %arg1[%199, %c0_193, %c0_194] : memref<16x1x128xf32, #tpu.memory_space<vmem>>, vector<1x1x128xf32>
    %201 = vector.shape_cast %200 : vector<1x1x128xf32> to vector<1x128xf32>
    %c7_195 = arith.constant 7 : index
    %c0_196 = arith.constant 0 : index
    %c0_197 = arith.constant 0 : index
    %202 = vector.load %arg6[%c7_195, %c0_196, %c0_197] : memref<8x8x128xf32, #tpu.memory_space<vmem>>, vector<1x1x128xf32>
    %203 = vector.shape_cast %202 : vector<1x1x128xf32> to vector<1x128xf32>
    %204 = vector.shape_cast %201 : vector<1x128xf32> to vector<1x1x128xf32>
    tpu.vector_store %arg6[%c7_195, %c0_196, %c0_197], %204 {strides = array<i32>} : memref<8x8x128xf32, #tpu.memory_space<vmem>>, vector<1x1x128xf32>,
    %c7_198 = arith.constant 7 : index
    %c1_199 = arith.constant 1 : index
    %205 = memref.load %arg0[%c7_198, %c1_199] : memref<8x4xi32, #tpu.memory_space<smem>>
    %206 = arith.index_cast %205 : i32 to index
    %c0_200 = arith.constant 0 : index
    %c0_201 = arith.constant 0 : index
    %207 = vector.load %arg1[%206, %c0_200, %c0_201] : memref<16x1x128xf32, #tpu.memory_space<vmem>>, vector<1x1x128xf32>
    %208 = vector.shape_cast %207 : vector<1x1x128xf32> to vector<1x128xf32>
    %c7_202 = arith.constant 7 : index
    %c1_203 = arith.constant 1 : index
    %c0_204 = arith.constant 0 : index
    %209 = vector.load %arg6[%c7_202, %c1_203, %c0_204] : memref<8x8x128xf32, #tpu.memory_space<vmem>>, vector<1x1x128xf32>
    %210 = vector.shape_cast %209 : vector<1x1x128xf32> to vector<1x128xf32>
    %211 = vector.shape_cast %208 : vector<1x128xf32> to vector<1x1x128xf32>
    tpu.vector_store %arg6[%c7_202, %c1_203, %c0_204], %211 {strides = array<i32>} : memref<8x8x128xf32, #tpu.memory_space<vmem>>, vector<1x1x128xf32>,
    %c7_205 = arith.constant 7 : index
    %c2_206 = arith.constant 2 : index
    %212 = memref.load %arg0[%c7_205, %c2_206] : memref<8x4xi32, #tpu.memory_space<smem>>
    %213 = arith.index_cast %212 : i32 to index
    %c0_207 = arith.constant 0 : index
    %c0_208 = arith.constant 0 : index
    %214 = vector.load %arg1[%213, %c0_207, %c0_208] : memref<16x1x128xf32, #tpu.memory_space<vmem>>, vector<1x1x128xf32>
    %215 = vector.shape_cast %214 : vector<1x1x128xf32> to vector<1x128xf32>
    %c7_209 = arith.constant 7 : index
    %c2_210 = arith.constant 2 : index
    %c0_211 = arith.constant 0 : index
    %216 = vector.load %arg6[%c7_209, %c2_210, %c0_211] : memref<8x8x128xf32, #tpu.memory_space<vmem>>, vector<1x1x128xf32>
    %217 = vector.shape_cast %216 : vector<1x1x128xf32> to vector<1x128xf32>
    %218 = vector.shape_cast %215 : vector<1x128xf32> to vector<1x1x128xf32>
    tpu.vector_store %arg6[%c7_209, %c2_210, %c0_211], %218 {strides = array<i32>} : memref<8x8x128xf32, #tpu.memory_space<vmem>>, vector<1x1x128xf32>,
    %c7_212 = arith.constant 7 : index
    %c3_213 = arith.constant 3 : index
    %219 = memref.load %arg0[%c7_212, %c3_213] : memref<8x4xi32, #tpu.memory_space<smem>>
    %220 = arith.index_cast %219 : i32 to index
    %c0_214 = arith.constant 0 : index
    %c0_215 = arith.constant 0 : index
    %221 = vector.load %arg1[%220, %c0_214, %c0_215] : memref<16x1x128xf32, #tpu.memory_space<vmem>>, vector<1x1x128xf32>
    %222 = vector.shape_cast %221 : vector<1x1x128xf32> to vector<1x128xf32>
    %c7_216 = arith.constant 7 : index
    %c3_217 = arith.constant 3 : index
    %c0_218 = arith.constant 0 : index
    %223 = vector.load %arg6[%c7_216, %c3_217, %c0_218] : memref<8x8x128xf32, #tpu.memory_space<vmem>>, vector<1x1x128xf32>
    %224 = vector.shape_cast %223 : vector<1x1x128xf32> to vector<1x128xf32>
    %225 = vector.shape_cast %222 : vector<1x128xf32> to vector<1x1x128xf32>
    tpu.vector_store %arg6[%c7_216, %c3_217, %c0_218], %225 {strides = array<i32>} : memref<8x8x128xf32, #tpu.memory_space<vmem>>, vector<1x1x128xf32>,
    %c0_219 = arith.constant 0 : index
    %c0_220 = arith.constant 0 : index
    %226 = vector.load %arg2[%c0_219, %c0_220] : memref<128x128xf32, #tpu.memory_space<vmem>>, vector<128x128xf32>
    %c0_221 = arith.constant 0 : index
    %c0_222 = arith.constant 0 : index
    %c0_223 = arith.constant 0 : index
    %227 = vector.load %arg6[%c0_221, %c0_222, %c0_223] : memref<8x8x128xf32, #tpu.memory_space<vmem>>, vector<1x8x128xf32>
    %228 = vector.shape_cast %227 : vector<1x8x128xf32> to vector<8x128xf32>
    %229 = math.tanh %228 : vector<8x128xf32>
    %c1_224 = arith.constant 1 : index
    %c0_225 = arith.constant 0 : index
    %c0_226 = arith.constant 0 : index
    %230 = vector.load %arg6[%c1_224, %c0_225, %c0_226] : memref<8x8x128xf32, #tpu.memory_space<vmem>>, vector<1x8x128xf32>
    %231 = vector.shape_cast %230 : vector<1x8x128xf32> to vector<8x128xf32>
    %cst_227 = arith.constant dense<0.000000e+00> : vector<8x128xf32>
    %232 = tpu.matmul %229, %226, %cst_227 {dimension_numbers = #tpu.dot_dimension_numbers<[1], [0], [0], [1], [0, 0, 1, 1], [], []>} : vector<8x128xf32>, vector<128x128xf32>, vector<8x128xf32> -> vector<8x128xf32>
    %233 = arith.addf %231, %232 : vector<8x128xf32>
    %234 = math.tanh %233 : vector<8x128xf32>
    %c2_228 = arith.constant 2 : index
    %c0_229 = arith.constant 0 : index
    %c0_230 = arith.constant 0 : index
    %235 = vector.load %arg6[%c2_228, %c0_229, %c0_230] : memref<8x8x128xf32, #tpu.memory_space<vmem>>, vector<1x8x128xf32>
    %236 = vector.shape_cast %235 : vector<1x8x128xf32> to vector<8x128xf32>
    %cst_231 = arith.constant dense<0.000000e+00> : vector<8x128xf32>
    %237 = tpu.matmul %234, %226, %cst_231 {dimension_numbers = #tpu.dot_dimension_numbers<[1], [0], [0], [1], [0, 0, 1, 1], [], []>} : vector<8x128xf32>, vector<128x128xf32>, vector<8x128xf32> -> vector<8x128xf32>
    %238 = arith.addf %236, %237 : vector<8x128xf32>
    %239 = math.tanh %238 : vector<8x128xf32>
    %c3_232 = arith.constant 3 : index
    %c0_233 = arith.constant 0 : index
    %c0_234 = arith.constant 0 : index
    %240 = vector.load %arg6[%c3_232, %c0_233, %c0_234] : memref<8x8x128xf32, #tpu.memory_space<vmem>>, vector<1x8x128xf32>
    %241 = vector.shape_cast %240 : vector<1x8x128xf32> to vector<8x128xf32>
    %cst_235 = arith.constant dense<0.000000e+00> : vector<8x128xf32>
    %242 = tpu.matmul %239, %226, %cst_235 {dimension_numbers = #tpu.dot_dimension_numbers<[1], [0], [0], [1], [0, 0, 1, 1], [], []>} : vector<8x128xf32>, vector<128x128xf32>, vector<8x128xf32> -> vector<8x128xf32>
    %243 = arith.addf %241, %242 : vector<8x128xf32>
    %244 = math.tanh %243 : vector<8x128xf32>
    %c4_236 = arith.constant 4 : index
    %c0_237 = arith.constant 0 : index
    %c0_238 = arith.constant 0 : index
    %245 = vector.load %arg6[%c4_236, %c0_237, %c0_238] : memref<8x8x128xf32, #tpu.memory_space<vmem>>, vector<1x8x128xf32>
    %246 = vector.shape_cast %245 : vector<1x8x128xf32> to vector<8x128xf32>
    %cst_239 = arith.constant dense<0.000000e+00> : vector<8x128xf32>
    %247 = tpu.matmul %244, %226, %cst_239 {dimension_numbers = #tpu.dot_dimension_numbers<[1], [0], [0], [1], [0, 0, 1, 1], [], []>} : vector<8x128xf32>, vector<128x128xf32>, vector<8x128xf32> -> vector<8x128xf32>
    %248 = arith.addf %246, %247 : vector<8x128xf32>
    %249 = math.tanh %248 : vector<8x128xf32>
    %c5_240 = arith.constant 5 : index
    %c0_241 = arith.constant 0 : index
    %c0_242 = arith.constant 0 : index
    %250 = vector.load %arg6[%c5_240, %c0_241, %c0_242] : memref<8x8x128xf32, #tpu.memory_space<vmem>>, vector<1x8x128xf32>
    %251 = vector.shape_cast %250 : vector<1x8x128xf32> to vector<8x128xf32>
    %cst_243 = arith.constant dense<0.000000e+00> : vector<8x128xf32>
    %252 = tpu.matmul %249, %226, %cst_243 {dimension_numbers = #tpu.dot_dimension_numbers<[1], [0], [0], [1], [0, 0, 1, 1], [], []>} : vector<8x128xf32>, vector<128x128xf32>, vector<8x128xf32> -> vector<8x128xf32>
    %253 = arith.addf %251, %252 : vector<8x128xf32>
    %254 = math.tanh %253 : vector<8x128xf32>
    %c6_244 = arith.constant 6 : index
    %c0_245 = arith.constant 0 : index
    %c0_246 = arith.constant 0 : index
    %255 = vector.load %arg6[%c6_244, %c0_245, %c0_246] : memref<8x8x128xf32, #tpu.memory_space<vmem>>, vector<1x8x128xf32>
    %256 = vector.shape_cast %255 : vector<1x8x128xf32> to vector<8x128xf32>
    %cst_247 = arith.constant dense<0.000000e+00> : vector<8x128xf32>
    %257 = tpu.matmul %254, %226, %cst_247 {dimension_numbers = #tpu.dot_dimension_numbers<[1], [0], [0], [1], [0, 0, 1, 1], [], []>} : vector<8x128xf32>, vector<128x128xf32>, vector<8x128xf32> -> vector<8x128xf32>
    %258 = arith.addf %256, %257 : vector<8x128xf32>
    %259 = math.tanh %258 : vector<8x128xf32>
    %c7_248 = arith.constant 7 : index
    %c0_249 = arith.constant 0 : index
    %c0_250 = arith.constant 0 : index
    %260 = vector.load %arg6[%c7_248, %c0_249, %c0_250] : memref<8x8x128xf32, #tpu.memory_space<vmem>>, vector<1x8x128xf32>
    %261 = vector.shape_cast %260 : vector<1x8x128xf32> to vector<8x128xf32>
    %cst_251 = arith.constant dense<0.000000e+00> : vector<8x128xf32>
    %262 = tpu.matmul %259, %226, %cst_251 {dimension_numbers = #tpu.dot_dimension_numbers<[1], [0], [0], [1], [0, 0, 1, 1], [], []>} : vector<8x128xf32>, vector<128x128xf32>, vector<8x128xf32> -> vector<8x128xf32>
    %263 = arith.addf %261, %262 : vector<8x128xf32>
    %264 = math.tanh %263 : vector<8x128xf32>
    %c0_252 = arith.constant 0 : index
    %c0_253 = arith.constant 0 : index
    %265 = vector.load %arg3[%c0_252, %c0_253] : memref<128x128xf32, #tpu.memory_space<vmem>>, vector<128x128xf32>
    %cst_254 = arith.constant dense<0.000000e+00> : vector<8x128xf32>
    %266 = tpu.matmul %264, %265, %cst_254 {dimension_numbers = #tpu.dot_dimension_numbers<[1], [0], [0], [1], [0, 0, 1, 1], [], []>} : vector<8x128xf32>, vector<128x128xf32>, vector<8x128xf32> -> vector<8x128xf32>
    %c0_255 = arith.constant 0 : index
    %c0_256 = arith.constant 0 : index
    %267 = vector.load %arg4[%c0_255, %c0_256] : memref<1x128xf32, #tpu.memory_space<vmem>>, vector<1x128xf32>
    %268 = vector.broadcast %267 : vector<1x128xf32> to vector<8x128xf32>
    %269 = arith.addf %266, %268 : vector<8x128xf32>
    %c0_257 = arith.constant 0 : index
    %c0_258 = arith.constant 0 : index
    %270 = vector.load %arg5[%c0_257, %c0_258] : memref<8x128xf32, #tpu.memory_space<vmem>>, vector<8x128xf32>
    tpu.vector_store %arg5[%c0_257, %c0_258], %269 {strides = array<i32>} : memref<8x128xf32, #tpu.memory_space<vmem>>, vector<8x128xf32>,
    return
  }
}

</mosaic_0001>

<llo_original>
// kernel: textrnn_forward.1
$region0: #{textrnn_forward.1}
  #allocation0 [shape = 'u32[]', space=smem, size = 0x4, offset = 0x4, fixed_abs, tag = 'smem constant byte address 0x4 - core index']
  #allocation1 [shape = 'u32[144,128]{1,0:T(1,128)}', space=vmem, size = 0x12000, scoped, tag = 'internal scratch']
  #allocation2 [shape = 'f32[8,8,128]{2,1,0:T(8,128)}', space=vmem, size = 0x8000, scoped, tag = 'scratch operand']
  %s0 = inlined_call_operand.vmem [shape: s32[8,4], index: 0, kind: input, shape index: {}]
  %s1 = inlined_call_operand.vmem [shape: f32[16,1,128], index: 1, kind: input, shape index: {}]
  %s2 = inlined_call_operand.vmem [shape: f32[128,128], index: 2, kind: input, shape index: {}]
  %s3 = inlined_call_operand.vmem [shape: f32[128,128], index: 3, kind: input, shape index: {}]
  %s4 = inlined_call_operand.vmem [shape: f32[1,128], index: 4, kind: input, shape index: {}]
  %s5 = inlined_call_operand.vmem [shape: f32[8,128], index: 5, kind: output, shape index: {}]
  %s6 = sld [smem:[#allocation0]]
  $region34: #{textrnn_forward.1} parent=0
    _
  %s8 = ssub.s32 1, %s6
  %s9 = scalar_select 0, %s8, %s6
  $region1: #{textrnn_forward.1} parent=0
    #allocation3 [shape = 'u8[4096]{0}', space=smem, size = 0x1000, scoped, tag = 'input window, operand 0, single buffered']
    #allocation4 [shape = 's32[1]{0}', space=sflag, size = 0x4, scoped, tag = 'scoped memory for textrnn_forward.1']
    %10 = vsyncpa [#allocation4], 0
    // Predicated region
    $region2: #{textrnn_forward.1} parent=1 // pred_check
      _
    $region3: #{textrnn_forward.1} parent=1 // pred_check_branch
      %12 = sbr.rel (0) target = $region5
    $region4: #{textrnn_forward.1} parent=1 // pred_region
      %s14 = ssub.s32 128, 128
      %15 = vsyncadd [#allocation4], %s14
      %s17 = sshll.u32 %s0, 4
      %s18 = int_to_ptr.vmem [resolvable:$true] %s17
      %20 = dma.vmem_to_smem %s18, 128, [#allocation3], [#allocation4]
    $region5: #{textrnn_forward.1} parent=1 // pred_fallthru
      _
    // Predicated region
    $region6: #{textrnn_forward.1} parent=1 // pred_check
      _
    $region7: #{textrnn_forward.1} parent=1 // pred_check_branch
      %22 = sbr.rel (0) target = $region9
    $region8: #{textrnn_forward.1} parent=1 // pred_region
      _
    $region9: #{textrnn_forward.1} parent=1 // pred_fallthru
      _
    // Predicated region
    $region10: #{textrnn_forward.1} parent=1 // pred_check
      _
    $region11: #{textrnn_forward.1} parent=1 // pred_check_branch
      %24 = sbr.rel (0) target = $region13
    $region12: #{textrnn_forward.1} parent=1 // pred_region
      _
    $region13: #{textrnn_forward.1} parent=1 // pred_fallthru
      _
    // Predicated region
    $region14: #{textrnn_forward.1} parent=1 // pred_check
      _
    $region15: #{textrnn_forward.1} parent=1 // pred_check_branch
      %26 = sbr.rel (0) target = $region17
    $region16: #{textrnn_forward.1} parent=1 // pred_region
      _
    $region17: #{textrnn_forward.1} parent=1 // pred_fallthru
      _
    // Predicated region
    $region18: #{textrnn_forward.1} parent=1 // pred_check
      _
    $region19: #{textrnn_forward.1} parent=1 // pred_check_branch
      %28 = sbr.rel (0) target = $region21
    $region20: #{textrnn_forward.1} parent=1 // pred_region
      _
    $region21: #{textrnn_forward.1} parent=1 // pred_fallthru
      _
    // Predicated region
    $region22: #{textrnn_forward.1} parent=1 // pred_check
      _
    $region23: #{textrnn_forward.1} parent=1 // pred_check_branch
      %30 = sbr.rel (0) target = $region25
    $region24: #{textrnn_forward.1} parent=1 // pred_region
      %31 = dma.done [#allocation4], 128
    $region25: #{textrnn_forward.1} parent=1 // pred_fallthru
      _
    %32 = sfence
    %33 = vst [vmem:[#allocation2] sm:$0xff] 0.0
    %34 = vst [vmem:[#allocation2 + $0x8] sm:$0xff] 0.0
    %35 = vst [vmem:[#allocation2 + $0x10] sm:$0xff] 0.0
    %36 = vst [vmem:[#allocation2 + $0x18] sm:$0xff] 0.0
    %37 = vst [vmem:[#allocation2 + $0x20] sm:$0xff] 0.0
    %38 = vst [vmem:[#allocation2 + $0x28] sm:$0xff] 0.0
    %39 = vst [vmem:[#allocation2 + $0x30] sm:$0xff] 0.0
    %40 = vst [vmem:[#allocation2 + $0x38] sm:$0xff] 0.0
    %s41 = sld [smem:[#allocation3]]
    %s42 = scalar_lea.vmem %s1, %s41
    %v43 = vld [vmem:[%s42] sm:$0x1]
    %44 = vst [vmem:[#allocation2] sm:$0x1] %v43
    %s45 = sld [smem:[#allocation3 + $0x1]]
    %s46 = scalar_lea.vmem %s1, %s45
    %v47 = vld [vmem:[%s46] sm:$0x1]
    %48 = vst [vmem:[#allocation2 + $0x1] sm:$0x1] %v47
    %s49 = sld [smem:[#allocation3 + $0x2]]
    %s50 = scalar_lea.vmem %s1, %s49
    %v51 = vld [vmem:[%s50] sm:$0x1]
    %52 = vst [vmem:[#allocation2 + $0x2] sm:$0x1] %v51
    %s53 = sld [smem:[#allocation3 + $0x3]]
    %s54 = scalar_lea.vmem %s1, %s53
    %v55 = vld [vmem:[%s54] sm:$0x1]
    %56 = vst [vmem:[#allocation2 + $0x3] sm:$0x1] %v55
    %s57 = sld [smem:[#allocation3 + $0x80]]
    %s58 = scalar_lea.vmem %s1, %s57
    %v59 = vld [vmem:[%s58] sm:$0x1]
    %s60 = scalar_lea.vmem [#allocation2], 8
    %61 = vst [vmem:[%s60] sm:$0x1] %v59
    %s62 = sld [smem:[#allocation3 + $0x81]]
    %s63 = scalar_lea.vmem %s1, %s62
    %v64 = vld [vmem:[%s63] sm:$0x1]
    %65 = vst [vmem:[%s60 + $0x1] sm:$0x1] %v64
    %s66 = sld [smem:[#allocation3 + $0x82]]
    %s67 = scalar_lea.vmem %s1, %s66
    %v68 = vld [vmem:[%s67] sm:$0x1]
    %69 = vst [vmem:[%s60 + $0x2] sm:$0x1] %v68
    %s70 = sld [smem:[#allocation3 + $0x83]]
    %s71 = scalar_lea.vmem %s1, %s70
    %v72 = vld [vmem:[%s71] sm:$0x1]
    %73 = vst [vmem:[%s60 + $0x3] sm:$0x1] %v72
    %s74 = sld [smem:[#allocation3 + $0x100]]
    %s75 = scalar_lea.vmem %s1, %s74
    %v76 = vld [vmem:[%s75] sm:$0x1]
    %s77 = scalar_lea.vmem [#allocation2], 16
    %78 = vst [vmem:[%s77] sm:$0x1] %v76
    %s79 = sld [smem:[#allocation3 + $0x101]]
    %s80 = scalar_lea.vmem %s1, %s79
    %v81 = vld [vmem:[%s80] sm:$0x1]
    %82 = vst [vmem:[%s77 + $0x1] sm:$0x1] %v81
    %s83 = sld [smem:[#allocation3 + $0x102]]
    %s84 = scalar_lea.vmem %s1, %s83
    %v85 = vld [vmem:[%s84] sm:$0x1]
    %86 = vst [vmem:[%s77 + $0x2] sm:$0x1] %v85
    %s87 = sld [smem:[#allocation3 + $0x103]]
    %s88 = scalar_lea.vmem %s1, %s87
    %v89 = vld [vmem:[%s88] sm:$0x1]
    %90 = vst [vmem:[%s77 + $0x3] sm:$0x1] %v89
    %s91 = sld [smem:[#allocation3 + $0x180]]
    %s92 = scalar_lea.vmem %s1, %s91
    %v93 = vld [vmem:[%s92] sm:$0x1]
    %s94 = scalar_lea.vmem [#allocation2], 24
    %95 = vst [vmem:[%s94] sm:$0x1] %v93
    %s96 = sld [smem:[#allocation3 + $0x181]]
    %s97 = scalar_lea.vmem %s1, %s96
    %v98 = vld [vmem:[%s97] sm:$0x1]
    %99 = vst [vmem:[%s94 + $0x1] sm:$0x1] %v98
    %s100 = sld [smem:[#allocation3 + $0x182]]
    %s101 = scalar_lea.vmem %s1, %s100
    %v102 = vld [vmem:[%s101] sm:$0x1]
    %103 = vst [vmem:[%s94 + $0x2] sm:$0x1] %v102
    %s104 = sld [smem:[#allocation3 + $0x183]]
    %s105 = scalar_lea.vmem %s1, %s104
    %v106 = vld [vmem:[%s105] sm:$0x1]
    %107 = vst [vmem:[%s94 + $0x3] sm:$0x1] %v106
    %s108 = sld [smem:[#allocation3 + $0x200]]
    %s109 = scalar_lea.vmem %s1, %s108
    %v110 = vld [vmem:[%s109] sm:$0x1]
    %s111 = scalar_lea.vmem [#allocation2], 32
    %112 = vst [vmem:[%s111] sm:$0x1] %v110
    %s113 = sld [smem:[#allocation3 + $0x201]]
    %s114 = scalar_lea.vmem %s1, %s113
    %v115 = vld [vmem:[%s114] sm:$0x1]
    %116 = vst [vmem:[%s111 + $0x1] sm:$0x1] %v115
    %s117 = sld [smem:[#allocation3 + $0x202]]
    %s118 = scalar_lea.vmem %s1, %s117
    %v119 = vld [vmem:[%s118] sm:$0x1]
    %120 = vst [vmem:[%s111 + $0x2] sm:$0x1] %v119
    %s121 = sld [smem:[#allocation3 + $0x203]]
    %s122 = scalar_lea.vmem %s1, %s121
    %v123 = vld [vmem:[%s122] sm:$0x1]
    %124 = vst [vmem:[%s111 + $0x3] sm:$0x1] %v123
    %s125 = sld [smem:[#allocation3 + $0x280]]
    %s126 = scalar_lea.vmem %s1, %s125
    %v127 = vld [vmem:[%s126] sm:$0x1]
    %s128 = scalar_lea.vmem [#allocation2], 40
    %129 = vst [vmem:[%s128] sm:$0x1] %v127
    %s130 = sld [smem:[#allocation3 + $0x281]]
    %s131 = scalar_lea.vmem %s1, %s130
    %v132 = vld [vmem:[%s131] sm:$0x1]
    %133 = vst [vmem:[%s128 + $0x1] sm:$0x1] %v132
    %s134 = sld [smem:[#allocation3 + $0x282]]
    %s135 = scalar_lea.vmem %s1, %s134
    %v136 = vld [vmem:[%s135] sm:$0x1]
    %137 = vst [vmem:[%s128 + $0x2] sm:$0x1] %v136
    %s138 = sld [smem:[#allocation3 + $0x283]]
    %s139 = scalar_lea.vmem %s1, %s138
    %v140 = vld [vmem:[%s139] sm:$0x1]
    %141 = vst [vmem:[%s128 + $0x3] sm:$0x1] %v140
    %s142 = sld [smem:[#allocation3 + $0x300]]
    %s143 = scalar_lea.vmem %s1, %s142
    %v144 = vld [vmem:[%s143] sm:$0x1]
    %s145 = scalar_lea.vmem [#allocation2], 48
    %146 = vst [vmem:[%s145] sm:$0x1] %v144
    %s147 = sld [smem:[#allocation3 + $0x301]]
    %s148 = scalar_lea.vmem %s1, %s147
    %v149 = vld [vmem:[%s148] sm:$0x1]
    %150 = vst [vmem:[%s145 + $0x1] sm:$0x1] %v149
    %s151 = sld [smem:[#allocation3 + $0x302]]
    %s152 = scalar_lea.vmem %s1, %s151
    %v153 = vld [vmem:[%s152] sm:$0x1]
    %154 = vst [vmem:[%s145 + $0x2] sm:$0x1] %v153
    %s155 = sld [smem:[#allocation3 + $0x303]]
    %s156 = scalar_lea.vmem %s1, %s155
    %v157 = vld [vmem:[%s156] sm:$0x1]
    %158 = vst [vmem:[%s145 + $0x3] sm:$0x1] %v157
    %s159 = sld [smem:[#allocation3 + $0x380]]
    %s160 = scalar_lea.vmem %s1, %s159
    %v161 = vld [vmem:[%s160] sm:$0x1]
    %s162 = scalar_lea.vmem [#allocation2], 56
    %163 = vst [vmem:[%s162] sm:$0x1] %v161
    %s164 = sld [smem:[#allocation3 + $0x381]]
    %s165 = scalar_lea.vmem %s1, %s164
    %v166 = vld [vmem:[%s165] sm:$0x1]
    %167 = vst [vmem:[%s162 + $0x1] sm:$0x1] %v166
    %s168 = sld [smem:[#allocation3 + $0x382]]
    %s169 = scalar_lea.vmem %s1, %s168
    %v170 = vld [vmem:[%s169] sm:$0x1]
    %171 = vst [vmem:[%s162 + $0x2] sm:$0x1] %v170
    %s172 = sld [smem:[#allocation3 + $0x383]]
    %s173 = scalar_lea.vmem %s1, %s172
    %v174 = vld [vmem:[%s173] sm:$0x1]
    %175 = vst [vmem:[%s162 + $0x3] sm:$0x1] %v174
    %v176 = vld [vmem:[%s2] sm:$0xff]
    %v177 = vld [vmem:[%s2 + $0x8] sm:$0xff]
    %v178 = vld [vmem:[%s2 + $0x10] sm:$0xff]
    %v179 = vld [vmem:[%s2 + $0x18] sm:$0xff]
    %v180 = vld [vmem:[%s2 + $0x20] sm:$0xff]
    %v181 = vld [vmem:[%s2 + $0x28] sm:$0xff]
    %v182 = vld [vmem:[%s2 + $0x30] sm:$0xff]
    %v183 = vld [vmem:[%s2 + $0x38] sm:$0xff]
    %v184 = vld [vmem:[%s2 + $0x40] sm:$0xff]
    %v185 = vld [vmem:[%s2 + $0x48] sm:$0xff]
    %v186 = vld [vmem:[%s2 + $0x50] sm:$0xff]
    %v187 = vld [vmem:[%s2 + $0x58] sm:$0xff]
    %v188 = vld [vmem:[%s2 + $0x60] sm:$0xff]
    %v189 = vld [vmem:[%s2 + $0x68] sm:$0xff]
    %v190 = vld [vmem:[%s2 + $0x70] sm:$0xff]
    %v191 = vld [vmem:[%s2 + $0x78] sm:$0xff]
    %v192 = vld [vmem:[#allocation2] sm:$0xff]
    %v193 = vtanh.pop %v192
    %v194 = vld [vmem:[%s60] sm:$0xff]
    %195 = vmatprep.subr.mxu0 0.0
    %196 = vmatpush1.msra.mxu0 %v191
    %197 = vmatprep.subr.mxu0 0.0
    %198 = vmatpush1.msra.mxu0 %v190
    %199 = vmatprep.subr.mxu0 0.0
    %200 = vmatpush1.msra.mxu0 %v189
    %201 = vmatprep.subr.mxu0 0.0
    %202 = vmatpush1.msra.mxu0 %v188
    %203 = vmatprep.subr.mxu0 0.0
    %204 = vmatpush1.msra.mxu0 %v187
    %205 = vmatprep.subr.mxu0 0.0
    %206 = vmatpush1.msra.mxu0 %v186
    %207 = vmatprep.subr.mxu0 0.0
    %208 = vmatpush1.msra.mxu0 %v185
    %209 = vmatprep.subr.mxu0 0.0
    %210 = vmatpush1.msra.mxu0 %v184
    %211 = vmatprep.subr.mxu0 0.0
    %212 = vmatpush1.msra.mxu0 %v183
    %213 = vmatprep.subr.mxu0 0.0
    %214 = vmatpush1.msra.mxu0 %v182
    %215 = vmatprep.subr.mxu0 0.0
    %216 = vmatpush1.msra.mxu0 %v181
    %217 = vmatprep.subr.mxu0 0.0
    %218 = vmatpush1.msra.mxu0 %v180
    %219 = vmatprep.subr.mxu0 0.0
    %220 = vmatpush1.msra.mxu0 %v179
    %221 = vmatprep.subr.mxu0 0.0
    %222 = vmatpush1.msra.mxu0 %v178
    %223 = vmatprep.subr.mxu0 0.0
    %224 = vmatpush1.msra.mxu0 %v177
    %225 = vmatprep.subr.mxu0 0.0
    %226 = vmatpush1.msra.mxu0 %v176
    %227 = vmatprep.subr.mxu0 0.0
    %228 = vmatpush2.msra.mxu0 0.0
    %229 = vmatprep.subr.mxu0 0.0
    %230 = vmatpush2.msra.mxu0 0.0
    %231 = vmatprep.subr.mxu0 0.0
    %232 = vmatpush2.msra.mxu0 0.0
    %233 = vmatprep.subr.mxu0 0.0
    %234 = vmatpush2.msra.mxu0 0.0
    %235 = vmatprep.subr.mxu0 0.0
    %236 = vmatpush2.msra.mxu0 0.0
    %237 = vmatprep.subr.mxu0 0.0
    %238 = vmatpush2.msra.mxu0 0.0
    %239 = vmatprep.subr.mxu0 0.0
    %240 = vmatpush2.msra.mxu0 0.0
    %241 = vmatprep.subr.mxu0 0.0
    %242 = vmatpush2.msra.mxu0 0.0
    %243 = vmatprep.subr.mxu0 0.0
    %244 = vmatpush2.msra.mxu0 0.0
    %245 = vmatprep.subr.mxu0 0.0
    %246 = vmatpush2.msra.mxu0 0.0
    %247 = vmatprep.subr.mxu0 0.0
    %248 = vmatpush2.msra.mxu0 0.0
    %249 = vmatprep.subr.mxu0 0.0
    %250 = vmatpush2.msra.mxu0 0.0
    %251 = vmatprep.subr.mxu0 0.0
    %252 = vmatpush2.msra.mxu0 0.0
    %253 = vmatprep.subr.mxu0 0.0
    %254 = vmatpush2.msra.mxu0 0.0
    %255 = vmatprep.subr.mxu0 0.0
    %256 = vmatpush2.msra.mxu0 0.0
    %257 = vmatprep.subr.mxu0 0.0
    %258 = vmatpush2.msra.mxu0 0.0
    %259 = vmatprep.mubr.f32.mxu0 0.0
    %260 = vmatmul.mubr.f32.gmra.mxu0 %v193
    %v261 = vpop.f32.mrf.mxu0
    %v262 = vadd.f32 0.0, %v261
    %v263 = vpop.f32.mrf.mxu0
    %264 = vdwg.mxu0
    %v265 = vadd.f32 %v194, %v262
    %v266 = vtanh.pop %v265
    %v267 = vld [vmem:[%s77] sm:$0xff]
    %268 = vmatprep.subr.mxu0 0.0
    %269 = vmatpush1.msra.mxu0 %v191
    %270 = vmatprep.subr.mxu0 0.0
    %271 = vmatpush1.msra.mxu0 %v190
    %272 = vmatprep.subr.mxu0 0.0
    %273 = vmatpush1.msra.mxu0 %v189
    %274 = vmatprep.subr.mxu0 0.0
    %275 = vmatpush1.msra.mxu0 %v188
    %276 = vmatprep.subr.mxu0 0.0
    %277 = vmatpush1.msra.mxu0 %v187
    %278 = vmatprep.subr.mxu0 0.0
    %279 = vmatpush1.msra.mxu0 %v186
    %280 = vmatprep.subr.mxu0 0.0
    %281 = vmatpush1.msra.mxu0 %v185
    %282 = vmatprep.subr.mxu0 0.0
    %283 = vmatpush1.msra.mxu0 %v184
    %284 = vmatprep.subr.mxu0 0.0
    %285 = vmatpush1.msra.mxu0 %v183
    %286 = vmatprep.subr.mxu0 0.0
    %287 = vmatpush1.msra.mxu0 %v182
    %288 = vmatprep.subr.mxu0 0.0
    %289 = vmatpush1.msra.mxu0 %v181
    %290 = vmatprep.subr.mxu0 0.0
    %291 = vmatpush1.msra.mxu0 %v180
    %292 = vmatprep.subr.mxu0 0.0
    %293 = vmatpush1.msra.mxu0 %v179
    %294 = vmatprep.subr.mxu0 0.0
    %295 = vmatpush1.msra.mxu0 %v178
    %296 = vmatprep.subr.mxu0 0.0
    %297 = vmatpush1.msra.mxu0 %v177
    %298 = vmatprep.subr.mxu0 0.0
    %299 = vmatpush1.msra.mxu0 %v176
    %300 = vmatprep.subr.mxu0 0.0
    %301 = vmatpush2.msra.mxu0 0.0
    %302 = vmatprep.subr.mxu0 0.0
    %303 = vmatpush2.msra.mxu0 0.0
    %304 = vmatprep.subr.mxu0 0.0
    %305 = vmatpush2.msra.mxu0 0.0
    %306 = vmatprep.subr.mxu0 0.0
    %307 = vmatpush2.msra.mxu0 0.0
    %308 = vmatprep.subr.mxu0 0.0
    %309 = vmatpush2.msra.mxu0 0.0
    %310 = vmatprep.subr.mxu0 0.0
    %311 = vmatpush2.msra.mxu0 0.0
    %312 = vmatprep.subr.mxu0 0.0
    %313 = vmatpush2.msra.mxu0 0.0
    %314 = vmatprep.subr.mxu0 0.0
    %315 = vmatpush2.msra.mxu0 0.0
    %316 = vmatprep.subr.mxu0 0.0
    %317 = vmatpush2.msra.mxu0 0.0
    %318 = vmatprep.subr.mxu0 0.0
    %319 = vmatpush2.msra.mxu0 0.0
    %320 = vmatprep.subr.mxu0 0.0
    %321 = vmatpush2.msra.mxu0 0.0
    %322 = vmatprep.subr.mxu0 0.0
    %323 = vmatpush2.msra.mxu0 0.0
    %324 = vmatprep.subr.mxu0 0.0
    %325 = vmatpush2.msra.mxu0 0.0
    %326 = vmatprep.subr.mxu0 0.0
    %327 = vmatpush2.msra.mxu0 0.0
    %328 = vmatprep.subr.mxu0 0.0
    %329 = vmatpush2.msra.mxu0 0.0
    %330 = vmatprep.subr.mxu0 0.0
    %331 = vmatpush2.msra.mxu0 0.0
    %332 = vmatprep.mubr.f32.mxu0 0.0
    %333 = vmatmul.mubr.f32.gmra.mxu0 %v266
    %v334 = vpop.f32.mrf.mxu0
    %v335 = vadd.f32 0.0, %v334
    %v336 = vpop.f32.mrf.mxu0
    %337 = vdwg.mxu0
    %v338 = vadd.f32 %v267, %v335
    %v339 = vtanh.pop %v338
    %v340 = vld [vmem:[%s94] sm:$0xff]
    %341 = vmatprep.subr.mxu0 0.0
    %342 = vmatpush1.msra.mxu0 %v191
    %343 = vmatprep.subr.mxu0 0.0
    %344 = vmatpush1.msra.mxu0 %v190
    %345 = vmatprep.subr.mxu0 0.0
    %346 = vmatpush1.msra.mxu0 %v189
    %347 = vmatprep.subr.mxu0 0.0
    %348 = vmatpush1.msra.mxu0 %v188
    %349 = vmatprep.subr.mxu0 0.0
    %350 = vmatpush1.msra.mxu0 %v187
    %351 = vmatprep.subr.mxu0 0.0
    %352 = vmatpush1.msra.mxu0 %v186
    %353 = vmatprep.subr.mxu0 0.0
    %354 = vmatpush1.msra.mxu0 %v185
    %355 = vmatprep.subr.mxu0 0.0
    %356 = vmatpush1.msra.mxu0 %v184
    %357 = vmatprep.subr.mxu0 0.0
    %358 = vmatpush1.msra.mxu0 %v183
    %359 = vmatprep.subr.mxu0 0.0
    %360 = vmatpush1.msra.mxu0 %v182
    %361 = vmatprep.subr.mxu0 0.0
    %362 = vmatpush1.msra.mxu0 %v181
    %363 = vmatprep.subr.mxu0 0.0
    %364 = vmatpush1.msra.mxu0 %v180
    %365 = vmatprep.subr.mxu0 0.0
    %366 = vmatpush1.msra.mxu0 %v179
    %367 = vmatprep.subr.mxu0 0.0
    %368 = vmatpush1.msra.mxu0 %v178
    %369 = vmatprep.subr.mxu0 0.0
    %370 = vmatpush1.msra.mxu0 %v177
    %371 = vmatprep.subr.mxu0 0.0
    %372 = vmatpush1.msra.mxu0 %v176
    %373 = vmatprep.subr.mxu0 0.0
    %374 = vmatpush2.msra.mxu0 0.0
    %375 = vmatprep.subr.mxu0 0.0
    %376 = vmatpush2.msra.mxu0 0.0
    %377 = vmatprep.subr.mxu0 0.0
    %378 = vmatpush2.msra.mxu0 0.0
    %379 = vmatprep.subr.mxu0 0.0
    %380 = vmatpush2.msra.mxu0 0.0
    %381 = vmatprep.subr.mxu0 0.0
    %382 = vmatpush2.msra.mxu0 0.0
    %383 = vmatprep.subr.mxu0 0.0
    %384 = vmatpush2.msra.mxu0 0.0
    %385 = vmatprep.subr.mxu0 0.0
    %386 = vmatpush2.msra.mxu0 0.0
    %387 = vmatprep.subr.mxu0 0.0
    %388 = vmatpush2.msra.mxu0 0.0
    %389 = vmatprep.subr.mxu0 0.0
    %390 = vmatpush2.msra.mxu0 0.0
    %391 = vmatprep.subr.mxu0 0.0
    %392 = vmatpush2.msra.mxu0 0.0
    %393 = vmatprep.subr.mxu0 0.0
    %394 = vmatpush2.msra.mxu0 0.0
    %395 = vmatprep.subr.mxu0 0.0
    %396 = vmatpush2.msra.mxu0 0.0
    %397 = vmatprep.subr.mxu0 0.0
    %398 = vmatpush2.msra.mxu0 0.0
    %399 = vmatprep.subr.mxu0 0.0
    %400 = vmatpush2.msra.mxu0 0.0
    %401 = vmatprep.subr.mxu0 0.0
    %402 = vmatpush2.msra.mxu0 0.0
    %403 = vmatprep.subr.mxu0 0.0
    %404 = vmatpush2.msra.mxu0 0.0
    %405 = vmatprep.mubr.f32.mxu0 0.0
    %406 = vmatmul.mubr.f32.gmra.mxu0 %v339
    %v407 = vpop.f32.mrf.mxu0
    %v408 = vadd.f32 0.0, %v407
    %v409 = vpop.f32.mrf.mxu0
    %410 = vdwg.mxu0
    %v411 = vadd.f32 %v340, %v408
    %v412 = vtanh.pop %v411
    %v413 = vld [vmem:[%s111] sm:$0xff]
    %414 = vmatprep.subr.mxu0 0.0
    %415 = vmatpush1.msra.mxu0 %v191
    %416 = vmatprep.subr.mxu0 0.0
    %417 = vmatpush1.msra.mxu0 %v190
    %418 = vmatprep.subr.mxu0 0.0
    %419 = vmatpush1.msra.mxu0 %v189
    %420 = vmatprep.subr.mxu0 0.0
    %421 = vmatpush1.msra.mxu0 %v188
    %422 = vmatprep.subr.mxu0 0.0
    %423 = vmatpush1.msra.mxu0 %v187
    %424 = vmatprep.subr.mxu0 0.0
    %425 = vmatpush1.msra.mxu0 %v186
    %426 = vmatprep.subr.mxu0 0.0
    %427 = vmatpush1.msra.mxu0 %v185
    %428 = vmatprep.subr.mxu0 0.0
    %429 = vmatpush1.msra.mxu0 %v184
    %430 = vmatprep.subr.mxu0 0.0
    %431 = vmatpush1.msra.mxu0 %v183
    %432 = vmatprep.subr.mxu0 0.0
    %433 = vmatpush1.msra.mxu0 %v182
    %434 = vmatprep.subr.mxu0 0.0
    %435 = vmatpush1.msra.mxu0 %v181
    %436 = vmatprep.subr.mxu0 0.0
    %437 = vmatpush1.msra.mxu0 %v180
    %438 = vmatprep.subr.mxu0 0.0
    %439 = vmatpush1.msra.mxu0 %v179
    %440 = vmatprep.subr.mxu0 0.0
    %441 = vmatpush1.msra.mxu0 %v178
    %442 = vmatprep.subr.mxu0 0.0
    %443 = vmatpush1.msra.mxu0 %v177
    %444 = vmatprep.subr.mxu0 0.0
    %445 = vmatpush1.msra.mxu0 %v176
    %446 = vmatprep.subr.mxu0 0.0
    %447 = vmatpush2.msra.mxu0 0.0
    %448 = vmatprep.subr.mxu0 0.0
    %449 = vmatpush2.msra.mxu0 0.0
    %450 = vmatprep.subr.mxu0 0.0
    %451 = vmatpush2.msra.mxu0 0.0
    %452 = vmatprep.subr.mxu0 0.0
    %453 = vmatpush2.msra.mxu0 0.0
    %454 = vmatprep.subr.mxu0 0.0
    %455 = vmatpush2.msra.mxu0 0.0
    %456 = vmatprep.subr.mxu0 0.0
    %457 = vmatpush2.msra.mxu0 0.0
    %458 = vmatprep.subr.mxu0 0.0
    %459 = vmatpush2.msra.mxu0 0.0
    %460 = vmatprep.subr.mxu0 0.0
    %461 = vmatpush2.msra.mxu0 0.0
    %462 = vmatprep.subr.mxu0 0.0
    %463 = vmatpush2.msra.mxu0 0.0
    %464 = vmatprep.subr.mxu0 0.0
    %465 = vmatpush2.msra.mxu0 0.0
    %466 = vmatprep.subr.mxu0 0.0
    %467 = vmatpush2.msra.mxu0 0.0
    %468 = vmatprep.subr.mxu0 0.0
    %469 = vmatpush2.msra.mxu0 0.0
    %470 = vmatprep.subr.mxu0 0.0
    %471 = vmatpush2.msra.mxu0 0.0
    %472 = vmatprep.subr.mxu0 0.0
    %473 = vmatpush2.msra.mxu0 0.0
    %474 = vmatprep.subr.mxu0 0.0
    %475 = vmatpush2.msra.mxu0 0.0
    %476 = vmatprep.subr.mxu0 0.0
    %477 = vmatpush2.msra.mxu0 0.0
    %478 = vmatprep.mubr.f32.mxu0 0.0
    %479 = vmatmul.mubr.f32.gmra.mxu0 %v412
    %v480 = vpop.f32.mrf.mxu0
    %v481 = vadd.f32 0.0, %v480
    %v482 = vpop.f32.mrf.mxu0
    %483 = vdwg.mxu0
    %v484 = vadd.f32 %v413, %v481
    %v485 = vtanh.pop %v484
    %v486 = vld [vmem:[%s128] sm:$0xff]
    %487 = vmatprep.subr.mxu0 0.0
    %488 = vmatpush1.msra.mxu0 %v191
    %489 = vmatprep.subr.mxu0 0.0
    %490 = vmatpush1.msra.mxu0 %v190
    %491 = vmatprep.subr.mxu0 0.0
    %492 = vmatpush1.msra.mxu0 %v189
    %493 = vmatprep.subr.mxu0 0.0
    %494 = vmatpush1.msra.mxu0 %v188
    %495 = vmatprep.subr.mxu0 0.0
    %496 = vmatpush1.msra.mxu0 %v187
    %497 = vmatprep.subr.mxu0 0.0
    %498 = vmatpush1.msra.mxu0 %v186
    %499 = vmatprep.subr.mxu0 0.0
    %500 = vmatpush1.msra.mxu0 %v185
    %501 = vmatprep.subr.mxu0 0.0
    %502 = vmatpush1.msra.mxu0 %v184
    %503 = vmatprep.subr.mxu0 0.0
    %504 = vmatpush1.msra.mxu0 %v183
    %505 = vmatprep.subr.mxu0 0.0
    %506 = vmatpush1.msra.mxu0 %v182
    %507 = vmatprep.subr.mxu0 0.0
    %508 = vmatpush1.msra.mxu0 %v181
    %509 = vmatprep.subr.mxu0 0.0
    %510 = vmatpush1.msra.mxu0 %v180
    %511 = vmatprep.subr.mxu0 0.0
    %512 = vmatpush1.msra.mxu0 %v179
    %513 = vmatprep.subr.mxu0 0.0
    %514 = vmatpush1.msra.mxu0 %v178
    %515 = vmatprep.subr.mxu0 0.0
    %516 = vmatpush1.msra.mxu0 %v177
    %517 = vmatprep.subr.mxu0 0.0
    %518 = vmatpush1.msra.mxu0 %v176
    %519 = vmatprep.subr.mxu0 0.0
    %520 = vmatpush2.msra.mxu0 0.0
    %521 = vmatprep.subr.mxu0 0.0
    %522 = vmatpush2.msra.mxu0 0.0
    %523 = vmatprep.subr.mxu0 0.0
    %524 = vmatpush2.msra.mxu0 0.0
    %525 = vmatprep.subr.mxu0 0.0
    %526 = vmatpush2.msra.mxu0 0.0
    %527 = vmatprep.subr.mxu0 0.0
    %528 = vmatpush2.msra.mxu0 0.0
    %529 = vmatprep.subr.mxu0 0.0
    %530 = vmatpush2.msra.mxu0 0.0
    %531 = vmatprep.subr.mxu0 0.0
    %532 = vmatpush2.msra.mxu0 0.0
    %533 = vmatprep.subr.mxu0 0.0
    %534 = vmatpush2.msra.mxu0 0.0
    %535 = vmatprep.subr.mxu0 0.0
    %536 = vmatpush2.msra.mxu0 0.0
    %537 = vmatprep.subr.mxu0 0.0
    %538 = vmatpush2.msra.mxu0 0.0
    %539 = vmatprep.subr.mxu0 0.0
    %540 = vmatpush2.msra.mxu0 0.0
    %541 = vmatprep.subr.mxu0 0.0
    %542 = vmatpush2.msra.mxu0 0.0
    %543 = vmatprep.subr.mxu0 0.0
    %544 = vmatpush2.msra.mxu0 0.0
    %545 = vmatprep.subr.mxu0 0.0
    %546 = vmatpush2.msra.mxu0 0.0
    %547 = vmatprep.subr.mxu0 0.0
    %548 = vmatpush2.msra.mxu0 0.0
    %549 = vmatprep.subr.mxu0 0.0
    %550 = vmatpush2.msra.mxu0 0.0
    %551 = vmatprep.mubr.f32.mxu0 0.0
    %552 = vmatmul.mubr.f32.gmra.mxu0 %v485
    %v553 = vpop.f32.mrf.mxu0
    %v554 = vadd.f32 0.0, %v553
    %v555 = vpop.f32.mrf.mxu0
    %556 = vdwg.mxu0
    %v557 = vadd.f32 %v486, %v554
    %v558 = vtanh.pop %v557
    %v559 = vld [vmem:[%s145] sm:$0xff]
    %560 = vmatprep.subr.mxu0 0.0
    %561 = vmatpush1.msra.mxu0 %v191
    %562 = vmatprep.subr.mxu0 0.0
    %563 = vmatpush1.msra.mxu0 %v190
    %564 = vmatprep.subr.mxu0 0.0
    %565 = vmatpush1.msra.mxu0 %v189
    %566 = vmatprep.subr.mxu0 0.0
    %567 = vmatpush1.msra.mxu0 %v188
    %568 = vmatprep.subr.mxu0 0.0
    %569 = vmatpush1.msra.mxu0 %v187
    %570 = vmatprep.subr.mxu0 0.0
    %571 = vmatpush1.msra.mxu0 %v186
    %572 = vmatprep.subr.mxu0 0.0
    %573 = vmatpush1.msra.mxu0 %v185
    %574 = vmatprep.subr.mxu0 0.0
    %575 = vmatpush1.msra.mxu0 %v184
    %576 = vmatprep.subr.mxu0 0.0
    %577 = vmatpush1.msra.mxu0 %v183
    %578 = vmatprep.subr.mxu0 0.0
    %579 = vmatpush1.msra.mxu0 %v182
    %580 = vmatprep.subr.mxu0 0.0
    %581 = vmatpush1.msra.mxu0 %v181
    %582 = vmatprep.subr.mxu0 0.0
    %583 = vmatpush1.msra.mxu0 %v180
    %584 = vmatprep.subr.mxu0 0.0
    %585 = vmatpush1.msra.mxu0 %v179
    %586 = vmatprep.subr.mxu0 0.0
    %587 = vmatpush1.msra.mxu0 %v178
    %588 = vmatprep.subr.mxu0 0.0
    %589 = vmatpush1.msra.mxu0 %v177
    %590 = vmatprep.subr.mxu0 0.0
    %591 = vmatpush1.msra.mxu0 %v176
    %592 = vmatprep.subr.mxu0 0.0
    %593 = vmatpush2.msra.mxu0 0.0
    %594 = vmatprep.subr.mxu0 0.0
    %595 = vmatpush2.msra.mxu0 0.0
    %596 = vmatprep.subr.mxu0 0.0
    %597 = vmatpush2.msra.mxu0 0.0
    %598 = vmatprep.subr.mxu0 0.0
    %599 = vmatpush2.msra.mxu0 0.0
    %600 = vmatprep.subr.mxu0 0.0
    %601 = vmatpush2.msra.mxu0 0.0
    %602 = vmatprep.subr.mxu0 0.0
    %603 = vmatpush2.msra.mxu0 0.0
    %604 = vmatprep.subr.mxu0 0.0
    %605 = vmatpush2.msra.mxu0 0.0
    %606 = vmatprep.subr.mxu0 0.0
    %607 = vmatpush2.msra.mxu0 0.0
    %608 = vmatprep.subr.mxu0 0.0
    %609 = vmatpush2.msra.mxu0 0.0
    %610 = vmatprep.subr.mxu0 0.0
    %611 = vmatpush2.msra.mxu0 0.0
    %612 = vmatprep.subr.mxu0 0.0
    %613 = vmatpush2.msra.mxu0 0.0
    %614 = vmatprep.subr.mxu0 0.0
    %615 = vmatpush2.msra.mxu0 0.0
    %616 = vmatprep.subr.mxu0 0.0
    %617 = vmatpush2.msra.mxu0 0.0
    %618 = vmatprep.subr.mxu0 0.0
    %619 = vmatpush2.msra.mxu0 0.0
    %620 = vmatprep.subr.mxu0 0.0
    %621 = vmatpush2.msra.mxu0 0.0
    %622 = vmatprep.subr.mxu0 0.0
    %623 = vmatpush2.msra.mxu0 0.0
    %624 = vmatprep.mubr.f32.mxu0 0.0
    %625 = vmatmul.mubr.f32.gmra.mxu0 %v558
    %v626 = vpop.f32.mrf.mxu0
    %v627 = vadd.f32 0.0, %v626
    %v628 = vpop.f32.mrf.mxu0
    %629 = vdwg.mxu0
    %v630 = vadd.f32 %v559, %v627
    %v631 = vtanh.pop %v630
    %v632 = vld [vmem:[%s162] sm:$0xff]
    %633 = vmatprep.subr.mxu0 0.0
    %634 = vmatpush1.msra.mxu0 %v191
    %635 = vmatprep.subr.mxu0 0.0
    %636 = vmatpush1.msra.mxu0 %v190
    %637 = vmatprep.subr.mxu0 0.0
    %638 = vmatpush1.msra.mxu0 %v189
    %639 = vmatprep.subr.mxu0 0.0
    %640 = vmatpush1.msra.mxu0 %v188
    %641 = vmatprep.subr.mxu0 0.0
    %642 = vmatpush1.msra.mxu0 %v187
    %643 = vmatprep.subr.mxu0 0.0
    %644 = vmatpush1.msra.mxu0 %v186
    %645 = vmatprep.subr.mxu0 0.0
    %646 = vmatpush1.msra.mxu0 %v185
    %647 = vmatprep.subr.mxu0 0.0
    %648 = vmatpush1.msra.mxu0 %v184
    %649 = vmatprep.subr.mxu0 0.0
    %650 = vmatpush1.msra.mxu0 %v183
    %651 = vmatprep.subr.mxu0 0.0
    %652 = vmatpush1.msra.mxu0 %v182
    %653 = vmatprep.subr.mxu0 0.0
    %654 = vmatpush1.msra.mxu0 %v181
    %655 = vmatprep.subr.mxu0 0.0
    %656 = vmatpush1.msra.mxu0 %v180
    %657 = vmatprep.subr.mxu0 0.0
    %658 = vmatpush1.msra.mxu0 %v179
    %659 = vmatprep.subr.mxu0 0.0
    %660 = vmatpush1.msra.mxu0 %v178
    %661 = vmatprep.subr.mxu0 0.0
    %662 = vmatpush1.msra.mxu0 %v177
    %663 = vmatprep.subr.mxu0 0.0
    %664 = vmatpush1.msra.mxu0 %v176
    %665 = vmatprep.subr.mxu0 0.0
    %666 = vmatpush2.msra.mxu0 0.0
    %667 = vmatprep.subr.mxu0 0.0
    %668 = vmatpush2.msra.mxu0 0.0
    %669 = vmatprep.subr.mxu0 0.0
    %670 = vmatpush2.msra.mxu0 0.0
    %671 = vmatprep.subr.mxu0 0.0
    %672 = vmatpush2.msra.mxu0 0.0
    %673 = vmatprep.subr.mxu0 0.0
    %674 = vmatpush2.msra.mxu0 0.0
    %675 = vmatprep.subr.mxu0 0.0
    %676 = vmatpush2.msra.mxu0 0.0
    %677 = vmatprep.subr.mxu0 0.0
    %678 = vmatpush2.msra.mxu0 0.0
    %679 = vmatprep.subr.mxu0 0.0
    %680 = vmatpush2.msra.mxu0 0.0
    %681 = vmatprep.subr.mxu0 0.0
    %682 = vmatpush2.msra.mxu0 0.0
    %683 = vmatprep.subr.mxu0 0.0
    %684 = vmatpush2.msra.mxu0 0.0
    %685 = vmatprep.subr.mxu0 0.0
    %686 = vmatpush2.msra.mxu0 0.0
    %687 = vmatprep.subr.mxu0 0.0
    %688 = vmatpush2.msra.mxu0 0.0
    %689 = vmatprep.subr.mxu0 0.0
    %690 = vmatpush2.msra.mxu0 0.0
    %691 = vmatprep.subr.mxu0 0.0
    %692 = vmatpush2.msra.mxu0 0.0
    %693 = vmatprep.subr.mxu0 0.0
    %694 = vmatpush2.msra.mxu0 0.0
    %695 = vmatprep.subr.mxu0 0.0
    %696 = vmatpush2.msra.mxu0 0.0
    %697 = vmatprep.mubr.f32.mxu0 0.0
    %698 = vmatmul.mubr.f32.gmra.mxu0 %v631
    %v699 = vpop.f32.mrf.mxu0
    %v700 = vadd.f32 0.0, %v699
    %v701 = vpop.f32.mrf.mxu0
    %702 = vdwg.mxu0
    %v703 = vadd.f32 %v632, %v700
    %v704 = vtanh.pop %v703
    %v705 = vld [vmem:[%s3] sm:$0xff]
    %v706 = vld [vmem:[%s3 + $0x8] sm:$0xff]
    %v707 = vld [vmem:[%s3 + $0x10] sm:$0xff]
    %v708 = vld [vmem:[%s3 + $0x18] sm:$0xff]
    %v709 = vld [vmem:[%s3 + $0x20] sm:$0xff]
    %v710 = vld [vmem:[%s3 + $0x28] sm:$0xff]
    %v711 = vld [vmem:[%s3 + $0x30] sm:$0xff]
    %v712 = vld [vmem:[%s3 + $0x38] sm:$0xff]
    %v713 = vld [vmem:[%s3 + $0x40] sm:$0xff]
    %v714 = vld [vmem:[%s3 + $0x48] sm:$0xff]
    %v715 = vld [vmem:[%s3 + $0x50] sm:$0xff]
    %v716 = vld [vmem:[%s3 + $0x58] sm:$0xff]
    %v717 = vld [vmem:[%s3 + $0x60] sm:$0xff]
    %v718 = vld [vmem:[%s3 + $0x68] sm:$0xff]
    %v719 = vld [vmem:[%s3 + $0x70] sm:$0xff]
    %v720 = vld [vmem:[%s3 + $0x78] sm:$0xff]
    %v721 = vld [vmem:[%s4] sm:$0x1]
    %v723 = vlaneseq
    %v724 = vshrl.u32 %v723, 7
    %v725 = vsub.s32 0, %v724
    %v726 = vrot.slane %v721, %v725
    %728 = vmatprep.subr.mxu0 0.0
    %729 = vmatpush1.msra.mxu0 %v720
    %730 = vmatprep.subr.mxu0 0.0
    %731 = vmatpush1.msra.mxu0 %v719
    %732 = vmatprep.subr.mxu0 0.0
    %733 = vmatpush1.msra.mxu0 %v718
    %734 = vmatprep.subr.mxu0 0.0
    %735 = vmatpush1.msra.mxu0 %v717
    %736 = vmatprep.subr.mxu0 0.0
    %737 = vmatpush1.msra.mxu0 %v716
    %738 = vmatprep.subr.mxu0 0.0
    %739 = vmatpush1.msra.mxu0 %v715
    %740 = vmatprep.subr.mxu0 0.0
    %741 = vmatpush1.msra.mxu0 %v714
    %742 = vmatprep.subr.mxu0 0.0
    %743 = vmatpush1.msra.mxu0 %v713
    %744 = vmatprep.subr.mxu0 0.0
    %745 = vmatpush1.msra.mxu0 %v712
    %746 = vmatprep.subr.mxu0 0.0
    %747 = vmatpush1.msra.mxu0 %v711
    %748 = vmatprep.subr.mxu0 0.0
    %749 = vmatpush1.msra.mxu0 %v710
    %750 = vmatprep.subr.mxu0 0.0
    %751 = vmatpush1.msra.mxu0 %v709
    %752 = vmatprep.subr.mxu0 0.0
    %753 = vmatpush1.msra.mxu0 %v708
    %754 = vmatprep.subr.mxu0 0.0
    %755 = vmatpush1.msra.mxu0 %v707
    %756 = vmatprep.subr.mxu0 0.0
    %757 = vmatpush1.msra.mxu0 %v706
    %758 = vmatprep.subr.mxu0 0.0
    %759 = vmatpush1.msra.mxu0 %v705
    %760 = vmatprep.subr.mxu0 0.0
    %761 = vmatpush2.msra.mxu0 0.0
    %762 = vmatprep.subr.mxu0 0.0
    %763 = vmatpush2.msra.mxu0 0.0
    %764 = vmatprep.subr.mxu0 0.0
    %765 = vmatpush2.msra.mxu0 0.0
    %766 = vmatprep.subr.mxu0 0.0
    %767 = vmatpush2.msra.mxu0 0.0
    %768 = vmatprep.subr.mxu0 0.0
    %769 = vmatpush2.msra.mxu0 0.0
    %770 = vmatprep.subr.mxu0 0.0
    %771 = vmatpush2.msra.mxu0 0.0
    %772 = vmatprep.subr.mxu0 0.0
    %773 = vmatpush2.msra.mxu0 0.0
    %774 = vmatprep.subr.mxu0 0.0
    %775 = vmatpush2.msra.mxu0 0.0
    %776 = vmatprep.subr.mxu0 0.0
    %777 = vmatpush2.msra.mxu0 0.0
    %778 = vmatprep.subr.mxu0 0.0
    %779 = vmatpush2.msra.mxu0 0.0
    %780 = vmatprep.subr.mxu0 0.0
    %781 = vmatpush2.msra.mxu0 0.0
    %782 = vmatprep.subr.mxu0 0.0
    %783 = vmatpush2.msra.mxu0 0.0
    %784 = vmatprep.subr.mxu0 0.0
    %785 = vmatpush2.msra.mxu0 0.0
    %786 = vmatprep.subr.mxu0 0.0
    %787 = vmatpush2.msra.mxu0 0.0
    %788 = vmatprep.subr.mxu0 0.0
    %789 = vmatpush2.msra.mxu0 0.0
    %790 = vmatprep.subr.mxu0 0.0
    %791 = vmatpush2.msra.mxu0 0.0
    %792 = vmatprep.mubr.f32.mxu0 0.0
    %793 = vmatmul.mubr.f32.gmra.mxu0 %v704
    %v794 = vpop.f32.mrf.mxu0
    %v795 = vadd.f32 %v726, %v794
    %v796 = vpop.f32.mrf.mxu0
    %797 = vdwg.mxu0
    %798 = vst [vmem:[%s5] sm:$0xff] %v795
    // Predicated region
    $region26: #{textrnn_forward.1} parent=1 // pred_check
      _
    $region27: #{textrnn_forward.1} parent=1 // pred_check_branch
      %800 = sbr.rel (0) target = $region29
    $region28: #{textrnn_forward.1} parent=1 // pred_region
      _
    $region29: #{textrnn_forward.1} parent=1 // pred_fallthru
      _
    // Predicated region
    $region30: #{textrnn_forward.1} parent=1 // pred_check
      _
    $region31: #{textrnn_forward.1} parent=1 // pred_check_branch
      %802 = sbr.rel (0) target = $region33
    $region32: #{textrnn_forward.1} parent=1 // pred_region
      _
    $region33: #{textrnn_forward.1} parent=1 // pred_fallthru
      _
    %803 = vsyncpa [#allocation4], 1

</llo_original>
